<compile_context>
chip_gen: v7x
topology: tpu7x:2x2x1
jax: 0.10.0
libtpu: 0.0.40
codegen_flags: <defaults>
</compile_context>

<pallas_src>
import functools

import numpy as np
import jax
import jax.numpy as jnp
from jax import lax
from jax.experimental import pallas as pl
from jax.experimental.pallas import tpu as pltpu

DIMENSIONS = 1024        # original: 10000
ALPHA = 0.85
MAX_ITER = 100
TOL = 1e-6
PAGERANK_UNROLL = 4      # power steps per convergence check (MAX_ITER % UNROLL == 0)


# ------------------------------------------------------------------ helpers --
def _device_vmem_bytes():
    """Physical VMEM capacity (v5e/v6e: 128 MiB, v7x: 64 MiB); conservative fallback."""
    try:
        cap = getattr(pltpu.get_tpu_info(), "vmem_capacity_bytes", None)
        if cap:
            return int(cap)
    except Exception:
        pass
    return 64 << 20


def _vmem_limit(needed_bytes):
    cap = _device_vmem_bytes()
    return int(min(max(needed_bytes, 32 << 20), int(0.9 * cap)))


# --------------------------------------------------------------- pagerank ---
def _pagerank_kernel(n_nodes, mt_ref, p_ref, v_ref):
    """Power iteration, PAGERANK_UNROLL steps per early-exit check.

    mt_ref: (Np, Np) = (alpha * M)^T, dense, zero padded
    p_ref : (1, Np)  = 1/N on the first N lanes, 0 on padding
    v_ref : (1, Np)  output pagerank vector (padded)
    """
    p = p_ref[...]
    mt = mt_ref[...]
    teleport = p * jnp.float32(1.0 - ALPHA)          # hoisted out of the loop
    thresh = jnp.float32(n_nodes * TOL)

    def one_step(v):
        # v <- v @ (alpha*M)^T + (1-alpha)*p   (lane axis last)
        return jnp.dot(v, mt, preferred_element_type=jnp.float32,
                       precision=lax.Precision.HIGHEST) + teleport

    n_groups = MAX_ITER // PAGERANK_UNROLL

    def cond(carry):
        g, err, _ = carry
        return jnp.logical_and(g < n_groups, err >= thresh)

    def body(carry):
        g, _, v = carry
        v_prev = v
        for _ in range(PAGERANK_UNROLL):             # statically unrolled
            v_prev = v
            v = one_step(v)
        err = jnp.sum(jnp.abs(v - v_prev))           # one XLU reduce per group
        return g + jnp.int32(1), err, v

    _, _, v_final = lax.while_loop(
        cond, body, (jnp.int32(0), jnp.float32(jnp.inf), p))
    v_ref[...] = v_final


def pagerank_pallas(mt, p, n_nodes):
    npad = mt.shape[0]
    mt_bytes = npad * npad * 4
    # TODO(synk): once 2*mt_bytes approaches ~90% of physical VMEM (Np >~ 2.1k on
    # v7x, >~ 2.7k on v5e/v6e), stream (tk, Np) slabs of mt from HBM per power
    # step instead of holding the dense matrix resident.
    vmem_limit = _vmem_limit(2 * mt_bytes + (8 << 20))
    kernel = functools.partial(_pagerank_kernel, n_nodes)
    return pl.pallas_call(
        kernel,
        out_shape=jax.ShapeDtypeStruct((1, npad), jnp.float32),
        grid=(1,),
        in_specs=[pl.BlockSpec((npad, npad), lambda i: (0, 0)),
                  pl.BlockSpec((1, npad), lambda i: (0, 0))],
        out_specs=pl.BlockSpec((1, npad), lambda i: (0, 0)),
        compiler_params=pltpu.CompilerParams(
            dimension_semantics=("arbitrary",),
            vmem_limit_bytes=vmem_limit),
    )(mt, p)


# -------------------------------------------- encode: bind + multiset (MXU) --
def _encode_kernel(a_ref, nd_ref, enc_ref):
    """Blocks: a (Np, Np) resident, nd (Np, TD), enc (1, TD).  Grid = (D//TD,).

    enc[d] = sum_e hv[row_e, d] * hv[col_e, d]
           = sum_i HV[i, d] * (A' @ HV)[i, d]     (A'[i,j] = 1 per unique edge)
    """
    hv = nd_ref[...]
    ahv = jnp.dot(a_ref[...], hv, preferred_element_type=jnp.float32,
                  precision=lax.Precision.HIGHEST)
    enc_ref[...] = jnp.sum(hv * ahv, axis=0, keepdims=True)


def encode_pallas(adj, nd, td):
    npad, d_pad = nd.shape
    a_bytes = npad * npad * 4
    blk_bytes = npad * td * 4
    vmem_limit = _vmem_limit(2 * a_bytes + 2 * blk_bytes + (8 << 20))
    return pl.pallas_call(
        _encode_kernel,
        out_shape=jax.ShapeDtypeStruct((1, d_pad), jnp.float32),
        grid=(d_pad // td,),
        in_specs=[pl.BlockSpec((npad, npad), lambda di: (0, 0)),   # resident
                  pl.BlockSpec((npad, td), lambda di: (0, di))],
        out_specs=pl.BlockSpec((1, td), lambda di: (0, di)),
        compiler_params=pltpu.CompilerParams(
            dimension_semantics=("parallel",),       # >=2 blocks -> v7x megacore
            vmem_limit_bytes=vmem_limit),
    )(adj, nd)


# ----------------------------------------------------------------- classify --
def _classify_kernel(enc_ref, wt_ref, out_ref, acc_ref):
    # nn.Linear(DIMENSIONS, num_classes, bias=False): logit = enc @ W^T
    @pl.when(pl.program_id(0) == 0)
    def _init():
        acc_ref[...] = jnp.zeros_like(acc_ref)
    acc_ref[...] += jnp.dot(enc_ref[...], wt_ref[...],
                            preferred_element_type=jnp.float32,
                            precision=lax.Precision.HIGHEST)
    @pl.when(pl.program_id(0) == pl.num_programs(0) - 1)
    def _fin():
        out_ref[...] = acc_ref[...]


def classify_pallas(enc_pad, wt_pad, td):
    d_pad = enc_pad.shape[1]
    cpad = wt_pad.shape[1]
    return pl.pallas_call(
        _classify_kernel,
        out_shape=jax.ShapeDtypeStruct((1, cpad), jnp.float32),
        grid=(d_pad // td,),
        in_specs=[pl.BlockSpec((1, td), lambda k: (0, k)),
                  pl.BlockSpec((td, cpad), lambda k: (k, 0))],
        out_specs=pl.BlockSpec((1, cpad), lambda k: (0, 0)),
        scratch_shapes=[pltpu.VMEM((1, cpad), jnp.float32)],
        compiler_params=pltpu.CompilerParams(
            dimension_semantics=("arbitrary",),
            vmem_limit_bytes=_vmem_limit(4 * td * cpad + (8 << 20))),
    )(enc_pad, wt_pad)


# ------------------------------------------------------------ tiling helper --
def _pad_and_tile_d(d):
    """Pad D so a big lane tile divides it and the parallel D grid has >=2 blocks."""
    d_pad = -(-d // 512) * 512 if d >= 512 else -(-d // 128) * 128
    if d_pad % 512 == 0 and d_pad // 512 >= 2:
        td = 512
    elif d_pad % 256 == 0 and d_pad // 256 >= 2:
        td = 256
    elif d_pad % 128 == 0 and d_pad // 128 >= 2:
        td = 128
    else:
        td = d_pad
    return d_pad, td


# ------------------------------------------------------------ full forward ---
def graphhd_forward(edge_index, num_nodes, node_id_weight, classify_weight):
    """edge_index: int32[2, E] numpy (concrete graph). Returns (pr, enc, logit)."""
    edge_index = np.asarray(edge_index, dtype=np.int32)
    rows_np, cols_np = edge_index[0], edge_index[1]
    N = int(num_nodes)
    C, D = classify_weight.shape

    # --- glue: dense (alpha*M)^T of sparse_stochastic_graph, padded to 128 ---
    deg = np.bincount(cols_np, minlength=N).astype(np.float32)
    vals = (1.0 / deg[cols_np]).astype(np.float32)
    M = np.zeros((N, N), np.float32)
    np.add.at(M, (rows_np, cols_np), vals)         # duplicate edges sum (COO semantics)
    npad = max(128, -(-N // 128) * 128)
    mt = np.zeros((npad, npad), np.float32)
    mt[:N, :N] = (ALPHA * M).T
    p = np.zeros((1, npad), np.float32)
    p[0, :N] = 1.0 / N

    # --- Pallas kernel 1: pagerank power iteration (coarse early exit) ---
    pr = pagerank_pallas(jnp.asarray(mt), jnp.asarray(p), N)[0, :N]

    # --- glue: rank permutation.  node_id_hvs[j] = node_ids[inv[j]] ---
    pr_argsort = jnp.argsort(pr)                    # stable ascending
    inv = jnp.zeros((N,), jnp.int32).at[pr_argsort].set(
        jnp.arange(N, dtype=jnp.int32))

    # --- glue (host): to_undirected = per-edge sort + unique columns ---
    # TODO(synk): torch.unique has data-dependent output shape; done on host.
    und = np.unique(np.sort(edge_index, axis=0), axis=1)
    row = jnp.asarray(und[0], jnp.int32)
    col = jnp.asarray(und[1], jnp.int32)

    # --- glue: undirected adjacency in hypervector-index space (folds the rank
    #     permutation, so no (N, D) hv scatter / (E, D) gather is materialized).
    # TODO(synk): for very large N a gather-based edge-block encode would be
    # preferable to this dense (Npad, Npad) adjacency.
    adj = jnp.zeros((npad, npad), jnp.float32).at[inv[row], inv[col]].add(1.0)

    # --- glue: padded node-id hypervectors (read once per D tile by kernel 2) ---
    d_pad, td = _pad_and_tile_d(D)
    nd = jnp.zeros((npad, d_pad), jnp.float32).at[:N, :D].set(node_id_weight[:N])

    # --- Pallas kernel 2: bind + multiset == colsum(HV .* (A' @ HV)) ---
    enc_pad = encode_pallas(adj, nd, td)            # (1, d_pad)

    # --- Pallas kernel 3: linear classify (class axis padded to 128 lanes) ---
    cpad = -(-C // 128) * 128
    wt_pad = jnp.zeros((d_pad, cpad), jnp.float32).at[:D, :C].set(
        jnp.asarray(classify_weight).T)
    logit_pad = classify_pallas(enc_pad, wt_pad, td)  # (1, cpad)

    return pr, enc_pad[0, :D], logit_pad[0, :C]


# --------------------------------------------------------------------- main ---
if __name__ == "__main__":
    key = jax.random.PRNGKey(0)
    N = 12               # num_nodes
    E_EXTRA = 20
    NUM_CLASSES = 4

    k1, k2, k3, k4 = jax.random.split(key, 4)
    # Random directed graph: every node appears as a source once + random extras.
    src_extra = jax.random.randint(k1, (E_EXTRA,), 0, N, dtype=jnp.int32)
    dst = jax.random.randint(k2, (N + E_EXTRA,), 0, N, dtype=jnp.int32)
    src = jnp.concatenate([jnp.arange(N, dtype=jnp.int32), src_extra])
    edge_index = np.asarray(jnp.stack([src, dst]), dtype=np.int32)   # [2, 32]

    # Deterministic synthetic parameters.
    node_id_weight = jnp.where(
        jax.random.bernoulli(k3, 0.5, (N, DIMENSIONS)), 1.0, -1.0
    ).astype(jnp.float32)                          # torchhd Random: +/-1 HVs
    classify_weight = (0.01 * jax.random.normal(
        k4, (NUM_CLASSES, DIMENSIONS))).astype(jnp.float32)

    pr, enc, logit = graphhd_forward(edge_index, N, node_id_weight, classify_weight)
    jax.block_until_ready(logit)

    # ----------------------------- pure numpy reference -----------------------
    deg = np.bincount(edge_index[1], minlength=N).astype(np.float32)
    vals = (1.0 / deg[edge_index[1]]).astype(np.float32)
    M = np.zeros((N, N), np.float32)
    np.add.at(M, (edge_index[0], edge_index[1]), vals)
    M = (ALPHA * M).astype(np.float32)
    pvec = np.full(N, 1.0 / N, np.float32)
    v = pvec.copy()
    # Mirror the kernel's coarse early exit: PAGERANK_UNROLL power steps per
    # convergence check (the torch module checks every step; extra steps only
    # move v closer to the fixed point, within TOL).
    it = 0
    while it < MAX_ITER:
        v_prev = v
        for _ in range(PAGERANK_UNROLL):
            v_prev = v
            v = (M @ v + pvec * (1.0 - ALPHA)).astype(np.float32)
            it += 1
        if np.abs(v - v_prev).sum() < N * TOL:
            break
    pr_ref = v
    order = np.argsort(pr_ref, kind="stable")
    hv_ref = np.zeros((N, DIMENSIONS), np.float32)
    hv_ref[order] = np.asarray(node_id_weight)[:N]
    und = np.unique(np.sort(edge_index, axis=0), axis=1)
    enc_ref = (hv_ref[und[0]] * hv_ref[und[1]]).sum(axis=0)
    logit_ref = enc_ref @ np.asarray(classify_weight).T

    np.testing.assert_allclose(np.asarray(pr), pr_ref, rtol=1e-4, atol=1e-4)
    np.testing.assert_allclose(np.asarray(enc), enc_ref, rtol=1e-4, atol=1e-3)
    np.testing.assert_allclose(np.asarray(logit), logit_ref, rtol=1e-4, atol=1e-3)

    print("KERNEL_OK")
</pallas_src>

<mosaic_0001>
module attributes {stable_mosaic.version = 11 : i64} {
  func.func @_pagerank_kernel(%arg0: i32, %arg1: memref<128x128xf32, #tpu.memory_space<vmem>>, %arg2: memref<1x128xf32, #tpu.memory_space<vmem>>, %arg3: memref<1x128xf32, #tpu.memory_space<vmem>>) attributes {dimension_semantics = [#tpu.dimension_semantics<arbitrary>], iteration_bounds = array<i64: 1>, scalar_prefetch = 0 : i64, scratch_operands = 0 : i64, tpu.core_type = #tpu.core_type<tc>, window_params = [{pipeline_mode = #tpu.pipeline_mode<synchronous>, transform_indices = @transform_0, window_bounds = array<i64: 128, 128>}, {pipeline_mode = #tpu.pipeline_mode<synchronous>, transform_indices = @transform_1, window_bounds = array<i64: 1, 128>}, {pipeline_mode = #tpu.pipeline_mode<synchronous>, transform_indices = @transform_2, window_bounds = array<i64: 1, 128>}]} {
    %c0 = arith.constant 0 : index
    %c0_0 = arith.constant 0 : index
    %0 = vector.load %arg2[%c0, %c0_0] : memref<1x128xf32, #tpu.memory_space<vmem>>, vector<1x128xf32>
    %c0_1 = arith.constant 0 : index
    %c0_2 = arith.constant 0 : index
    %1 = vector.load %arg1[%c0_1, %c0_2] : memref<128x128xf32, #tpu.memory_space<vmem>>, vector<128x128xf32>
    %cst = arith.constant 1.500000e-01 : f32
    %2 = vector.broadcast %cst : f32 to vector<1x128xf32>
    %3 = arith.mulf %0, %2 : vector<1x128xf32>
    %cst_3 = arith.constant 1.200000e-05 : f32
    %c0_i32 = arith.constant 0 : i32
    %cst_4 = arith.constant 0x7F800000 : f32
    %4:3 = scf.while (%arg4 = %c0_i32, %arg5 = %cst_4, %arg6 = %0) : (i32, f32, vector<1x128xf32>) -> (i32, f32, vector<1x128xf32>) {
      %c25_i32 = arith.constant 25 : i32
      %6 = arith.cmpi slt, %arg4, %c25_i32 : i32
      %7 = arith.cmpf oge, %arg5, %cst_3 : f32
      %8 = arith.andi %6, %7 : i1
      scf.condition(%8) %arg4, %arg5, %arg6 : i32, f32, vector<1x128xf32>
    } do {
    ^bb0(%arg4: i32, %arg5: f32, %arg6: vector<1x128xf32>):
      %cst_7 = arith.constant dense<0.000000e+00> : vector<1x128xf32>
      %6 = tpu.matmul %arg6, %1, %cst_7 {dimension_numbers = #tpu.dot_dimension_numbers<[1], [0], [0], [1], [0, 0, 1, 1], [], []>, precision = #tpu.contract_precision<fp32>} : vector<1x128xf32>, vector<128x128xf32>, vector<1x128xf32> -> vector<1x128xf32>
      %7 = arith.addf %6, %3 : vector<1x128xf32>
      %cst_8 = arith.constant dense<0.000000e+00> : vector<1x128xf32>
      %8 = tpu.matmul %7, %1, %cst_8 {dimension_numbers = #tpu.dot_dimension_numbers<[1], [0], [0], [1], [0, 0, 1, 1], [], []>, precision = #tpu.contract_precision<fp32>} : vector<1x128xf32>, vector<128x128xf32>, vector<1x128xf32> -> vector<1x128xf32>
      %9 = arith.addf %8, %3 : vector<1x128xf32>
      %cst_9 = arith.constant dense<0.000000e+00> : vector<1x128xf32>
      %10 = tpu.matmul %9, %1, %cst_9 {dimension_numbers = #tpu.dot_dimension_numbers<[1], [0], [0], [1], [0, 0, 1, 1], [], []>, precision = #tpu.contract_precision<fp32>} : vector<1x128xf32>, vector<128x128xf32>, vector<1x128xf32> -> vector<1x128xf32>
      %11 = arith.addf %10, %3 : vector<1x128xf32>
      %cst_10 = arith.constant dense<0.000000e+00> : vector<1x128xf32>
      %12 = tpu.matmul %11, %1, %cst_10 {dimension_numbers = #tpu.dot_dimension_numbers<[1], [0], [0], [1], [0, 0, 1, 1], [], []>, precision = #tpu.contract_precision<fp32>} : vector<1x128xf32>, vector<128x128xf32>, vector<1x128xf32> -> vector<1x128xf32>
      %13 = arith.addf %12, %3 : vector<1x128xf32>
      %14 = arith.subf %13, %11 : vector<1x128xf32>
      %15 = math.absf %14 : vector<1x128xf32>
      %16 = vector.shape_cast %15 : vector<1x128xf32> to vector<1x1x128xf32>
      %cst_11 = arith.constant dense<0.000000e+00> : vector<1xf32>
      %17 = vector.multi_reduction <add>, %16, %cst_11 [1, 2] : vector<1x1x128xf32> to vector<1xf32>
      %18 = vector.shape_cast %17 : vector<1xf32> to vector<1x1x1xf32>
      %19 = vector.extract %18[0, 0, 0] : f32 from vector<1x1x1xf32>
      %c1_i32 = arith.constant 1 : i32
      %20 = arith.addi %arg4, %c1_i32 : i32
      scf.yield %20, %19, %13 : i32, f32, vector<1x128xf32>
    }
    %c0_5 = arith.constant 0 : index
    %c0_6 = arith.constant 0 : index
    %5 = vector.load %arg3[%c0_5, %c0_6] : memref<1x128xf32, #tpu.memory_space<vmem>>, vector<1x128xf32>
    tpu.vector_store %arg3[%c0_5, %c0_6], %4#2 {strides = array<i32>} : memref<1x128xf32, #tpu.memory_space<vmem>>, vector<1x128xf32>,
    return
  }
  func.func @transform_0(%arg0: i32) -> (i32, i32) {
    %c0_i32 = arith.constant 0 : i32
    %c0_i32_0 = arith.constant 0 : i32
    %c0_i32_1 = arith.constant 0 : i32
    return %c0_i32, %c0_i32_0 : i32, i32
  }
  func.func @transform_1(%arg0: i32) -> (i32, i32) {
    %c0_i32 = arith.constant 0 : i32
    %c0_i32_0 = arith.constant 0 : i32
    %c0_i32_1 = arith.constant 0 : i32
    return %c0_i32, %c0_i32_0 : i32, i32
  }
  func.func @transform_2(%arg0: i32) -> (i32, i32) {
    %c0_i32 = arith.constant 0 : i32
    %c0_i32_0 = arith.constant 0 : i32
    %c0_i32_1 = arith.constant 0 : i32
    return %c0_i32, %c0_i32_0 : i32, i32
  }
}

</mosaic_0001>

<llo_original>
// kernel: tpu_custom_call.1
$region0: #{tpu_custom_call.1}
  #allocation0 [shape = 'u32[]', space=smem, size = 0x4, offset = 0x4, fixed_abs, tag = 'smem constant byte address 0x4 - core index']
  #allocation1 [shape = 'u32[144,128]{1,0:T(1,128)}', space=vmem, size = 0x12000, scoped, tag = 'internal scratch']
  %s0 = inlined_call_operand.hbm [shape: f32[128,128], index: 0, kind: input, shape index: {}]
  %s1 = inlined_call_operand.vmem [shape: f32[1,128], index: 1, kind: input, shape index: {}]
  %s2 = inlined_call_operand.hbm [shape: f32[1,128], index: 2, kind: output, shape index: {}]
  %s3 = sld [smem:[#allocation0]]
  $region29: #{tpu_custom_call.1} parent=0
    _
  %s5 = ssub.s32 1, %s3
  %s6 = scalar_select 0, %s5, %s3
  $region1: #{tpu_custom_call.1} parent=0
    #allocation2 [shape = 'u8[65536]{0}', space=vmem, size = 0x10000, scoped, tag = 'input window, operand 0, single buffered']
    #allocation3 [shape = 's32[1]{0}', space=sflag, size = 0x4, scoped, tag = 'scoped memory for tpu_custom_call.1']
    #allocation4 [shape = 's32[1]{0}', space=sflag, size = 0x4, scoped, tag = 'scoped memory for tpu_custom_call.1']
    #allocation5 [shape = 'u8[512]{0}', space=vmem, size = 0x400, scoped, tag = 'output window, operand 0, single buffered']
    %7 = vsyncpa [#allocation3], 0
    %8 = vsyncpa [#allocation4], 0
    // Predicated region
    $region2: #{tpu_custom_call.1} parent=1 // pred_check
      _
    $region3: #{tpu_custom_call.1} parent=1 // pred_check_branch
      %10 = sbr.rel (0) target = $region5
    $region4: #{tpu_custom_call.1} parent=1 // pred_region
      %s12 = ssub.s32 2048, 2048
      %13 = vsyncadd [#allocation3], %s12
      %s14 = sshll.u32 [#allocation2], 4
      %s15 = int_to_ptr.vmem [resolvable:$true] %s14
      %20 = dma.hbm_to_vmem [thread:$0]  %s0, 2048, %s15, [#allocation3], 128, 128, 8
    $region5: #{tpu_custom_call.1} parent=1 // pred_fallthru
      _
    // Predicated region
    $region6: #{tpu_custom_call.1} parent=1 // pred_check
      _
    $region7: #{tpu_custom_call.1} parent=1 // pred_check_branch
      %22 = sbr.rel (0) target = $region9
    $region8: #{tpu_custom_call.1} parent=1 // pred_region
      _
    $region9: #{tpu_custom_call.1} parent=1 // pred_fallthru
      _
    // Predicated region
    $region10: #{tpu_custom_call.1} parent=1 // pred_check
      _
    $region11: #{tpu_custom_call.1} parent=1 // pred_check_branch
      %24 = sbr.rel (0) target = $region13
    $region12: #{tpu_custom_call.1} parent=1 // pred_region
      %25 = dma.done [#allocation3], 2048
    $region13: #{tpu_custom_call.1} parent=1 // pred_fallthru
      _
    %v26 = vld [vmem:[%s1] sm:$0x1]
    %v27 = vld [vmem:[#allocation2] sm:$0xff]
    %v28 = vld [vmem:[#allocation2 + $0x8] sm:$0xff]
    %v29 = vld [vmem:[#allocation2 + $0x10] sm:$0xff]
    %v30 = vld [vmem:[#allocation2 + $0x18] sm:$0xff]
    %v31 = vld [vmem:[#allocation2 + $0x20] sm:$0xff]
    %v32 = vld [vmem:[#allocation2 + $0x28] sm:$0xff]
    %v33 = vld [vmem:[#allocation2 + $0x30] sm:$0xff]
    %v34 = vld [vmem:[#allocation2 + $0x38] sm:$0xff]
    %v35 = vld [vmem:[#allocation2 + $0x40] sm:$0xff]
    %v36 = vld [vmem:[#allocation2 + $0x48] sm:$0xff]
    %v37 = vld [vmem:[#allocation2 + $0x50] sm:$0xff]
    %v38 = vld [vmem:[#allocation2 + $0x58] sm:$0xff]
    %v39 = vld [vmem:[#allocation2 + $0x60] sm:$0xff]
    %v40 = vld [vmem:[#allocation2 + $0x68] sm:$0xff]
    %v41 = vld [vmem:[#allocation2 + $0x70] sm:$0xff]
    %v42 = vld [vmem:[#allocation2 + $0x78] sm:$0xff]
    %v43 = vmul.f32 %v26, 0.15
    // While loop
    $region14: #{tpu_custom_call.1} parent=1 // loop_pre_header
      _
    $region15: #{tpu_custom_call.1} parent=1 // loop_header
      %s45 = sphi 0, %s2631
      %s46 = sphi inf, %s2630
      %v47 = vphi %v26, %v2615
      %p48 = scmp.lt.s32.totalorder %s45, 25
      %p49 = scmp.ge.f32.partialorder %s46, 1.2e-05
      %p50 = pnand %p48, %p49
      %p51 = pneg %p50
    $region16: #{tpu_custom_call.1} parent=1 // loop_header_branch
      %53 = sbr.rel (%p50) target = $region20
    $region17: #{tpu_custom_call.1} parent=1 // loop_body
      %54 = vmatprep.subr.mxu0 0.0
      %v55 = vand.u32 %v27, 4294901760
      %56 = vmatpush1.msra.mxu0 %v55
      %57 = vmatprep.subr.mxu0 0.0
      %v58 = vand.u32 %v28, 4294901760
      %59 = vmatpush1.msra.mxu0 %v58
      %60 = vmatprep.subr.mxu0 0.0
      %v61 = vand.u32 %v29, 4294901760
      %62 = vmatpush1.msra.mxu0 %v61
      %63 = vmatprep.subr.mxu0 0.0
      %v64 = vand.u32 %v30, 4294901760
      %65 = vmatpush1.msra.mxu0 %v64
      %66 = vmatprep.subr.mxu0 0.0
      %v67 = vand.u32 %v31, 4294901760
      %68 = vmatpush1.msra.mxu0 %v67
      %69 = vmatprep.subr.mxu0 0.0
      %v70 = vand.u32 %v32, 4294901760
      %71 = vmatpush1.msra.mxu0 %v70
      %72 = vmatprep.subr.mxu0 0.0
      %v73 = vand.u32 %v33, 4294901760
      %74 = vmatpush1.msra.mxu0 %v73
      %75 = vmatprep.subr.mxu0 0.0
      %v76 = vand.u32 %v34, 4294901760
      %77 = vmatpush1.msra.mxu0 %v76
      %78 = vmatprep.subr.mxu0 0.0
      %v79 = vand.u32 %v35, 4294901760
      %80 = vmatpush1.msra.mxu0 %v79
      %81 = vmatprep.subr.mxu0 0.0
      %v82 = vand.u32 %v36, 4294901760
      %83 = vmatpush1.msra.mxu0 %v82
      %84 = vmatprep.subr.mxu0 0.0
      %v85 = vand.u32 %v37, 4294901760
      %86 = vmatpush1.msra.mxu0 %v85
      %87 = vmatprep.subr.mxu0 0.0
      %v88 = vand.u32 %v38, 4294901760
      %89 = vmatpush1.msra.mxu0 %v88
      %90 = vmatprep.subr.mxu0 0.0
      %v91 = vand.u32 %v39, 4294901760
      %92 = vmatpush1.msra.mxu0 %v91
      %93 = vmatprep.subr.mxu0 0.0
      %v94 = vand.u32 %v40, 4294901760
      %95 = vmatpush1.msra.mxu0 %v94
      %96 = vmatprep.subr.mxu0 0.0
      %v97 = vand.u32 %v41, 4294901760
      %98 = vmatpush1.msra.mxu0 %v97
      %99 = vmatprep.subr.mxu0 0.0
      %v100 = vand.u32 %v42, 4294901760
      %101 = vmatpush1.msra.mxu0 %v100
      %102 = vmatprep.subr.mxu0 0.0
      %103 = vmatpush1.msra.mxu0 0.0
      %104 = vmatprep.subr.mxu0 0.0
      %105 = vmatpush1.msra.mxu0 0.0
      %106 = vmatprep.subr.mxu0 0.0
      %107 = vmatpush1.msra.mxu0 0.0
      %108 = vmatprep.subr.mxu0 0.0
      %109 = vmatpush1.msra.mxu0 0.0
      %110 = vmatprep.subr.mxu0 0.0
      %111 = vmatpush1.msra.mxu0 0.0
      %112 = vmatprep.subr.mxu0 0.0
      %113 = vmatpush1.msra.mxu0 0.0
      %114 = vmatprep.subr.mxu0 0.0
      %115 = vmatpush1.msra.mxu0 0.0
      %116 = vmatprep.subr.mxu0 0.0
      %117 = vmatpush1.msra.mxu0 0.0
      %118 = vmatprep.subr.mxu0 0.0
      %119 = vmatpush1.msra.mxu0 0.0
      %120 = vmatprep.subr.mxu0 0.0
      %121 = vmatpush1.msra.mxu0 0.0
      %122 = vmatprep.subr.mxu0 0.0
      %123 = vmatpush1.msra.mxu0 0.0
      %124 = vmatprep.subr.mxu0 0.0
      %125 = vmatpush1.msra.mxu0 0.0
      %126 = vmatprep.subr.mxu0 0.0
      %127 = vmatpush1.msra.mxu0 0.0
      %128 = vmatprep.subr.mxu0 0.0
      %129 = vmatpush1.msra.mxu0 0.0
      %130 = vmatprep.subr.mxu0 0.0
      %131 = vmatpush1.msra.mxu0 0.0
      %132 = vmatprep.subr.mxu0 0.0
      %133 = vmatpush1.msra.mxu0 0.0
      %134 = vmatprep.mubr.f32.mxu0 0.0
      %v135 = vand.u32 %v47, 4294901760
      %v136 = vsub.f32 %v47, %v135
      %v137 = vand.u32 %v136, 4294901760
      %v138 = vsub.f32 %v136, %v137
      %v139 = vand.u32 %v138, 4294901760
      %140 = vmatmul.mubr.f32.gmra.mrb[0].mxu0 %v139
      %v141 = vpop.f32.mrb[0].mxu0
      %v142 = vadd.f32 %v43, %v141
      %v143 = vpop.f32.mrb[0].mxu0
      %144 = vdwg.mxu0
      %145 = vmatprep.subr.mxu0 0.0
      %v146 = vand.u32 %v27, 4294901760
      %v147 = vsub.f32 %v27, %v146
      %v148 = vand.u32 %v147, 4294901760
      %v149 = vsub.f32 %v147, %v148
      %v150 = vand.u32 %v149, 4294901760
      %151 = vmatpush1.msra.mxu0 %v150
      %152 = vmatprep.subr.mxu0 0.0
      %v153 = vand.u32 %v28, 4294901760
      %v154 = vsub.f32 %v28, %v153
      %v155 = vand.u32 %v154, 4294901760
      %v156 = vsub.f32 %v154, %v155
      %v157 = vand.u32 %v156, 4294901760
      %158 = vmatpush1.msra.mxu0 %v157
      %159 = vmatprep.subr.mxu0 0.0
      %v160 = vand.u32 %v29, 4294901760
      %v161 = vsub.f32 %v29, %v160
      %v162 = vand.u32 %v161, 4294901760
      %v163 = vsub.f32 %v161, %v162
      %v164 = vand.u32 %v163, 4294901760
      %165 = vmatpush1.msra.mxu0 %v164
      %166 = vmatprep.subr.mxu0 0.0
      %v167 = vand.u32 %v30, 4294901760
      %v168 = vsub.f32 %v30, %v167
      %v169 = vand.u32 %v168, 4294901760
      %v170 = vsub.f32 %v168, %v169
      %v171 = vand.u32 %v170, 4294901760
      %172 = vmatpush1.msra.mxu0 %v171
      %173 = vmatprep.subr.mxu0 0.0
      %v174 = vand.u32 %v31, 4294901760
      %v175 = vsub.f32 %v31, %v174
      %v176 = vand.u32 %v175, 4294901760
      %v177 = vsub.f32 %v175, %v176
      %v178 = vand.u32 %v177, 4294901760
      %179 = vmatpush1.msra.mxu0 %v178
      %180 = vmatprep.subr.mxu0 0.0
      %v181 = vand.u32 %v32, 4294901760
      %v182 = vsub.f32 %v32, %v181
      %v183 = vand.u32 %v182, 4294901760
      %v184 = vsub.f32 %v182, %v183
      %v185 = vand.u32 %v184, 4294901760
      %186 = vmatpush1.msra.mxu0 %v185
      %187 = vmatprep.subr.mxu0 0.0
      %v188 = vand.u32 %v33, 4294901760
      %v189 = vsub.f32 %v33, %v188
      %v190 = vand.u32 %v189, 4294901760
      %v191 = vsub.f32 %v189, %v190
      %v192 = vand.u32 %v191, 4294901760
      %193 = vmatpush1.msra.mxu0 %v192
      %194 = vmatprep.subr.mxu0 0.0
      %v195 = vand.u32 %v34, 4294901760
      %v196 = vsub.f32 %v34, %v195
      %v197 = vand.u32 %v196, 4294901760
      %v198 = vsub.f32 %v196, %v197
      %v199 = vand.u32 %v198, 4294901760
      %200 = vmatpush1.msra.mxu0 %v199
      %201 = vmatprep.subr.mxu0 0.0
      %v202 = vand.u32 %v35, 4294901760
      %v203 = vsub.f32 %v35, %v202
      %v204 = vand.u32 %v203, 4294901760
      %v205 = vsub.f32 %v203, %v204
      %v206 = vand.u32 %v205, 4294901760
      %207 = vmatpush1.msra.mxu0 %v206
      %208 = vmatprep.subr.mxu0 0.0
      %v209 = vand.u32 %v36, 4294901760
      %v210 = vsub.f32 %v36, %v209
      %v211 = vand.u32 %v210, 4294901760
      %v212 = vsub.f32 %v210, %v211
      %v213 = vand.u32 %v212, 4294901760
      %214 = vmatpush1.msra.mxu0 %v213
      %215 = vmatprep.subr.mxu0 0.0
      %v216 = vand.u32 %v37, 4294901760
      %v217 = vsub.f32 %v37, %v216
      %v218 = vand.u32 %v217, 4294901760
      %v219 = vsub.f32 %v217, %v218
      %v220 = vand.u32 %v219, 4294901760
      %221 = vmatpush1.msra.mxu0 %v220
      %222 = vmatprep.subr.mxu0 0.0
      %v223 = vand.u32 %v38, 4294901760
      %v224 = vsub.f32 %v38, %v223
      %v225 = vand.u32 %v224, 4294901760
      %v226 = vsub.f32 %v224, %v225
      %v227 = vand.u32 %v226, 4294901760
      %228 = vmatpush1.msra.mxu0 %v227
      %229 = vmatprep.subr.mxu0 0.0
      %v230 = vand.u32 %v39, 4294901760
      %v231 = vsub.f32 %v39, %v230
      %v232 = vand.u32 %v231, 4294901760
      %v233 = vsub.f32 %v231, %v232
      %v234 = vand.u32 %v233, 4294901760
      %235 = vmatpush1.msra.mxu0 %v234
      %236 = vmatprep.subr.mxu0 0.0
      %v237 = vand.u32 %v40, 4294901760
      %v238 = vsub.f32 %v40, %v237
      %v239 = vand.u32 %v238, 4294901760
      %v240 = vsub.f32 %v238, %v239
      %v241 = vand.u32 %v240, 4294901760
      %242 = vmatpush1.msra.mxu0 %v241
      %243 = vmatprep.subr.mxu0 0.0
      %v244 = vand.u32 %v41, 4294901760
      %v245 = vsub.f32 %v41, %v244
      %v246 = vand.u32 %v245, 4294901760
      %v247 = vsub.f32 %v245, %v246
      %v248 = vand.u32 %v247, 4294901760
      %249 = vmatpush1.msra.mxu0 %v248
      %250 = vmatprep.subr.mxu0 0.0
      %v251 = vand.u32 %v42, 4294901760
      %v252 = vsub.f32 %v42, %v251
      %v253 = vand.u32 %v252, 4294901760
      %v254 = vsub.f32 %v252, %v253
      %v255 = vand.u32 %v254, 4294901760
      %256 = vmatpush1.msra.mxu0 %v255
      %257 = vmatprep.subr.mxu0 0.0
      %258 = vmatpush1.msra.mxu0 0.0
      %259 = vmatprep.subr.mxu0 0.0
      %260 = vmatpush1.msra.mxu0 0.0
      %261 = vmatprep.subr.mxu0 0.0
      %262 = vmatpush1.msra.mxu0 0.0
      %263 = vmatprep.subr.mxu0 0.0
      %264 = vmatpush1.msra.mxu0 0.0
      %265 = vmatprep.subr.mxu0 0.0
      %266 = vmatpush1.msra.mxu0 0.0
      %267 = vmatprep.subr.mxu0 0.0
      %268 = vmatpush1.msra.mxu0 0.0
      %269 = vmatprep.subr.mxu0 0.0
      %270 = vmatpush1.msra.mxu0 0.0
      %271 = vmatprep.subr.mxu0 0.0
      %272 = vmatpush1.msra.mxu0 0.0
      %273 = vmatprep.subr.mxu0 0.0
      %274 = vmatpush1.msra.mxu0 0.0
      %275 = vmatprep.subr.mxu0 0.0
      %276 = vmatpush1.msra.mxu0 0.0
      %277 = vmatprep.subr.mxu0 0.0
      %278 = vmatpush1.msra.mxu0 0.0
      %279 = vmatprep.subr.mxu0 0.0
      %280 = vmatpush1.msra.mxu0 0.0
      %281 = vmatprep.subr.mxu0 0.0
      %282 = vmatpush1.msra.mxu0 0.0
      %283 = vmatprep.subr.mxu0 0.0
      %284 = vmatpush1.msra.mxu0 0.0
      %285 = vmatprep.subr.mxu0 0.0
      %286 = vmatpush1.msra.mxu0 0.0
      %287 = vmatprep.subr.mxu0 0.0
      %288 = vmatpush1.msra.mxu0 0.0
      %289 = vmatprep.mubr.f32.mxu0 0.0
      %v290 = vand.u32 %v47, 4294901760
      %291 = vmatmul.mubr.f32.gmra.mrb[0].mxu0 %v290
      %v292 = vpop.f32.mrb[0].mxu0
      %v293 = vadd.f32 %v142, %v292
      %v294 = vpop.f32.mrb[0].mxu0
      %295 = vdwg.mxu0
      %296 = vmatprep.subr.mxu0 0.0
      %v297 = vand.u32 %v27, 4294901760
      %v298 = vsub.f32 %v27, %v297
      %299 = vmatpush1.msra.mxu0 %v298
      %300 = vmatprep.subr.mxu0 0.0
      %v301 = vand.u32 %v28, 4294901760
      %v302 = vsub.f32 %v28, %v301
      %303 = vmatpush1.msra.mxu0 %v302
      %304 = vmatprep.subr.mxu0 0.0
      %v305 = vand.u32 %v29, 4294901760
      %v306 = vsub.f32 %v29, %v305
      %307 = vmatpush1.msra.mxu0 %v306
      %308 = vmatprep.subr.mxu0 0.0
      %v309 = vand.u32 %v30, 4294901760
      %v310 = vsub.f32 %v30, %v309
      %311 = vmatpush1.msra.mxu0 %v310
      %312 = vmatprep.subr.mxu0 0.0
      %v313 = vand.u32 %v31, 4294901760
      %v314 = vsub.f32 %v31, %v313
      %315 = vmatpush1.msra.mxu0 %v314
      %316 = vmatprep.subr.mxu0 0.0
      %v317 = vand.u32 %v32, 4294901760
      %v318 = vsub.f32 %v32, %v317
      %319 = vmatpush1.msra.mxu0 %v318
      %320 = vmatprep.subr.mxu0 0.0
      %v321 = vand.u32 %v33, 4294901760
      %v322 = vsub.f32 %v33, %v321
      %323 = vmatpush1.msra.mxu0 %v322
      %324 = vmatprep.subr.mxu0 0.0
      %v325 = vand.u32 %v34, 4294901760
      %v326 = vsub.f32 %v34, %v325
      %327 = vmatpush1.msra.mxu0 %v326
      %328 = vmatprep.subr.mxu0 0.0
      %v329 = vand.u32 %v35, 4294901760
      %v330 = vsub.f32 %v35, %v329
      %331 = vmatpush1.msra.mxu0 %v330
      %332 = vmatprep.subr.mxu0 0.0
      %v333 = vand.u32 %v36, 4294901760
      %v334 = vsub.f32 %v36, %v333
      %335 = vmatpush1.msra.mxu0 %v334
      %336 = vmatprep.subr.mxu0 0.0
      %v337 = vand.u32 %v37, 4294901760
      %v338 = vsub.f32 %v37, %v337
      %339 = vmatpush1.msra.mxu0 %v338
      %340 = vmatprep.subr.mxu0 0.0
      %v341 = vand.u32 %v38, 4294901760
      %v342 = vsub.f32 %v38, %v341
      %343 = vmatpush1.msra.mxu0 %v342
      %344 = vmatprep.subr.mxu0 0.0
      %v345 = vand.u32 %v39, 4294901760
      %v346 = vsub.f32 %v39, %v345
      %347 = vmatpush1.msra.mxu0 %v346
      %348 = vmatprep.subr.mxu0 0.0
      %v349 = vand.u32 %v40, 4294901760
      %v350 = vsub.f32 %v40, %v349
      %351 = vmatpush1.msra.mxu0 %v350
      %352 = vmatprep.subr.mxu0 0.0
      %v353 = vand.u32 %v41, 4294901760
      %v354 = vsub.f32 %v41, %v353
      %355 = vmatpush1.msra.mxu0 %v354
      %356 = vmatprep.subr.mxu0 0.0
      %v357 = vand.u32 %v42, 4294901760
      %v358 = vsub.f32 %v42, %v357
      %359 = vmatpush1.msra.mxu0 %v358
      %360 = vmatprep.subr.mxu0 0.0
      %361 = vmatpush1.msra.mxu0 0.0
      %362 = vmatprep.subr.mxu0 0.0
      %363 = vmatpush1.msra.mxu0 0.0
      %364 = vmatprep.subr.mxu0 0.0
      %365 = vmatpush1.msra.mxu0 0.0
      %366 = vmatprep.subr.mxu0 0.0
      %367 = vmatpush1.msra.mxu0 0.0
      %368 = vmatprep.subr.mxu0 0.0
      %369 = vmatpush1.msra.mxu0 0.0
      %370 = vmatprep.subr.mxu0 0.0
      %371 = vmatpush1.msra.mxu0 0.0
      %372 = vmatprep.subr.mxu0 0.0
      %373 = vmatpush1.msra.mxu0 0.0
      %374 = vmatprep.subr.mxu0 0.0
      %375 = vmatpush1.msra.mxu0 0.0
      %376 = vmatprep.subr.mxu0 0.0
      %377 = vmatpush1.msra.mxu0 0.0
      %378 = vmatprep.subr.mxu0 0.0
      %379 = vmatpush1.msra.mxu0 0.0
      %380 = vmatprep.subr.mxu0 0.0
      %381 = vmatpush1.msra.mxu0 0.0
      %382 = vmatprep.subr.mxu0 0.0
      %383 = vmatpush1.msra.mxu0 0.0
      %384 = vmatprep.subr.mxu0 0.0
      %385 = vmatpush1.msra.mxu0 0.0
      %386 = vmatprep.subr.mxu0 0.0
      %387 = vmatpush1.msra.mxu0 0.0
      %388 = vmatprep.subr.mxu0 0.0
      %389 = vmatpush1.msra.mxu0 0.0
      %390 = vmatprep.subr.mxu0 0.0
      %391 = vmatpush1.msra.mxu0 0.0
      %392 = vmatprep.mubr.f32.mxu0 0.0
      %v393 = vand.u32 %v47, 4294901760
      %v394 = vsub.f32 %v47, %v393
      %395 = vmatmul.mubr.f32.gmra.mrb[0].mxu0 %v394
      %v396 = vpop.f32.mrb[0].mxu0
      %v397 = vadd.f32 %v293, %v396
      %v398 = vpop.f32.mrb[0].mxu0
      %399 = vdwg.mxu0
      %400 = vmatprep.subr.mxu0 0.0
      %v401 = vand.u32 %v27, 4294901760
      %402 = vmatpush1.msra.mxu0 %v401
      %403 = vmatprep.subr.mxu0 0.0
      %v404 = vand.u32 %v28, 4294901760
      %405 = vmatpush1.msra.mxu0 %v404
      %406 = vmatprep.subr.mxu0 0.0
      %v407 = vand.u32 %v29, 4294901760
      %408 = vmatpush1.msra.mxu0 %v407
      %409 = vmatprep.subr.mxu0 0.0
      %v410 = vand.u32 %v30, 4294901760
      %411 = vmatpush1.msra.mxu0 %v410
      %412 = vmatprep.subr.mxu0 0.0
      %v413 = vand.u32 %v31, 4294901760
      %414 = vmatpush1.msra.mxu0 %v413
      %415 = vmatprep.subr.mxu0 0.0
      %v416 = vand.u32 %v32, 4294901760
      %417 = vmatpush1.msra.mxu0 %v416
      %418 = vmatprep.subr.mxu0 0.0
      %v419 = vand.u32 %v33, 4294901760
      %420 = vmatpush1.msra.mxu0 %v419
      %421 = vmatprep.subr.mxu0 0.0
      %v422 = vand.u32 %v34, 4294901760
      %423 = vmatpush1.msra.mxu0 %v422
      %424 = vmatprep.subr.mxu0 0.0
      %v425 = vand.u32 %v35, 4294901760
      %426 = vmatpush1.msra.mxu0 %v425
      %427 = vmatprep.subr.mxu0 0.0
      %v428 = vand.u32 %v36, 4294901760
      %429 = vmatpush1.msra.mxu0 %v428
      %430 = vmatprep.subr.mxu0 0.0
      %v431 = vand.u32 %v37, 4294901760
      %432 = vmatpush1.msra.mxu0 %v431
      %433 = vmatprep.subr.mxu0 0.0
      %v434 = vand.u32 %v38, 4294901760
      %435 = vmatpush1.msra.mxu0 %v434
      %436 = vmatprep.subr.mxu0 0.0
      %v437 = vand.u32 %v39, 4294901760
      %438 = vmatpush1.msra.mxu0 %v437
      %439 = vmatprep.subr.mxu0 0.0
      %v440 = vand.u32 %v40, 4294901760
      %441 = vmatpush1.msra.mxu0 %v440
      %442 = vmatprep.subr.mxu0 0.0
      %v443 = vand.u32 %v41, 4294901760
      %444 = vmatpush1.msra.mxu0 %v443
      %445 = vmatprep.subr.mxu0 0.0
      %v446 = vand.u32 %v42, 4294901760
      %447 = vmatpush1.msra.mxu0 %v446
      %448 = vmatprep.subr.mxu0 0.0
      %449 = vmatpush1.msra.mxu0 0.0
      %450 = vmatprep.subr.mxu0 0.0
      %451 = vmatpush1.msra.mxu0 0.0
      %452 = vmatprep.subr.mxu0 0.0
      %453 = vmatpush1.msra.mxu0 0.0
      %454 = vmatprep.subr.mxu0 0.0
      %455 = vmatpush1.msra.mxu0 0.0
      %456 = vmatprep.subr.mxu0 0.0
      %457 = vmatpush1.msra.mxu0 0.0
      %458 = vmatprep.subr.mxu0 0.0
      %459 = vmatpush1.msra.mxu0 0.0
      %460 = vmatprep.subr.mxu0 0.0
      %461 = vmatpush1.msra.mxu0 0.0
      %462 = vmatprep.subr.mxu0 0.0
      %463 = vmatpush1.msra.mxu0 0.0
      %464 = vmatprep.subr.mxu0 0.0
      %465 = vmatpush1.msra.mxu0 0.0
      %466 = vmatprep.subr.mxu0 0.0
      %467 = vmatpush1.msra.mxu0 0.0
      %468 = vmatprep.subr.mxu0 0.0
      %469 = vmatpush1.msra.mxu0 0.0
      %470 = vmatprep.subr.mxu0 0.0
      %471 = vmatpush1.msra.mxu0 0.0
      %472 = vmatprep.subr.mxu0 0.0
      %473 = vmatpush1.msra.mxu0 0.0
      %474 = vmatprep.subr.mxu0 0.0
      %475 = vmatpush1.msra.mxu0 0.0
      %476 = vmatprep.subr.mxu0 0.0
      %477 = vmatpush1.msra.mxu0 0.0
      %478 = vmatprep.subr.mxu0 0.0
      %479 = vmatpush1.msra.mxu0 0.0
      %480 = vmatprep.mubr.f32.mxu0 0.0
      %v481 = vand.u32 %v47, 4294901760
      %v482 = vsub.f32 %v47, %v481
      %v483 = vand.u32 %v482, 4294901760
      %484 = vmatmul.mubr.f32.gmra.mrb[0].mxu0 %v483
      %v485 = vpop.f32.mrb[0].mxu0
      %v486 = vadd.f32 %v397, %v485
      %v487 = vpop.f32.mrb[0].mxu0
      %488 = vdwg.mxu0
      %489 = vmatprep.subr.mxu0 0.0
      %v490 = vand.u32 %v27, 4294901760
      %v491 = vsub.f32 %v27, %v490
      %v492 = vand.u32 %v491, 4294901760
      %493 = vmatpush1.msra.mxu0 %v492
      %494 = vmatprep.subr.mxu0 0.0
      %v495 = vand.u32 %v28, 4294901760
      %v496 = vsub.f32 %v28, %v495
      %v497 = vand.u32 %v496, 4294901760
      %498 = vmatpush1.msra.mxu0 %v497
      %499 = vmatprep.subr.mxu0 0.0
      %v500 = vand.u32 %v29, 4294901760
      %v501 = vsub.f32 %v29, %v500
      %v502 = vand.u32 %v501, 4294901760
      %503 = vmatpush1.msra.mxu0 %v502
      %504 = vmatprep.subr.mxu0 0.0
      %v505 = vand.u32 %v30, 4294901760
      %v506 = vsub.f32 %v30, %v505
      %v507 = vand.u32 %v506, 4294901760
      %508 = vmatpush1.msra.mxu0 %v507
      %509 = vmatprep.subr.mxu0 0.0
      %v510 = vand.u32 %v31, 4294901760
      %v511 = vsub.f32 %v31, %v510
      %v512 = vand.u32 %v511, 4294901760
      %513 = vmatpush1.msra.mxu0 %v512
      %514 = vmatprep.subr.mxu0 0.0
      %v515 = vand.u32 %v32, 4294901760
      %v516 = vsub.f32 %v32, %v515
      %v517 = vand.u32 %v516, 4294901760
      %518 = vmatpush1.msra.mxu0 %v517
      %519 = vmatprep.subr.mxu0 0.0
      %v520 = vand.u32 %v33, 4294901760
      %v521 = vsub.f32 %v33, %v520
      %v522 = vand.u32 %v521, 4294901760
      %523 = vmatpush1.msra.mxu0 %v522
      %524 = vmatprep.subr.mxu0 0.0
      %v525 = vand.u32 %v34, 4294901760
      %v526 = vsub.f32 %v34, %v525
      %v527 = vand.u32 %v526, 4294901760
      %528 = vmatpush1.msra.mxu0 %v527
      %529 = vmatprep.subr.mxu0 0.0
      %v530 = vand.u32 %v35, 4294901760
      %v531 = vsub.f32 %v35, %v530
      %v532 = vand.u32 %v531, 4294901760
      %533 = vmatpush1.msra.mxu0 %v532
      %534 = vmatprep.subr.mxu0 0.0
      %v535 = vand.u32 %v36, 4294901760
      %v536 = vsub.f32 %v36, %v535
      %v537 = vand.u32 %v536, 4294901760
      %538 = vmatpush1.msra.mxu0 %v537
      %539 = vmatprep.subr.mxu0 0.0
      %v540 = vand.u32 %v37, 4294901760
      %v541 = vsub.f32 %v37, %v540
      %v542 = vand.u32 %v541, 4294901760
      %543 = vmatpush1.msra.mxu0 %v542
      %544 = vmatprep.subr.mxu0 0.0
      %v545 = vand.u32 %v38, 4294901760
      %v546 = vsub.f32 %v38, %v545
      %v547 = vand.u32 %v546, 4294901760
      %548 = vmatpush1.msra.mxu0 %v547
      %549 = vmatprep.subr.mxu0 0.0
      %v550 = vand.u32 %v39, 4294901760
      %v551 = vsub.f32 %v39, %v550
      %v552 = vand.u32 %v551, 4294901760
      %553 = vmatpush1.msra.mxu0 %v552
      %554 = vmatprep.subr.mxu0 0.0
      %v555 = vand.u32 %v40, 4294901760
      %v556 = vsub.f32 %v40, %v555
      %v557 = vand.u32 %v556, 4294901760
      %558 = vmatpush1.msra.mxu0 %v557
      %559 = vmatprep.subr.mxu0 0.0
      %v560 = vand.u32 %v41, 4294901760
      %v561 = vsub.f32 %v41, %v560
      %v562 = vand.u32 %v561, 4294901760
      %563 = vmatpush1.msra.mxu0 %v562
      %564 = vmatprep.subr.mxu0 0.0
      %v565 = vand.u32 %v42, 4294901760
      %v566 = vsub.f32 %v42, %v565
      %v567 = vand.u32 %v566, 4294901760
      %568 = vmatpush1.msra.mxu0 %v567
      %569 = vmatprep.subr.mxu0 0.0
      %570 = vmatpush1.msra.mxu0 0.0
      %571 = vmatprep.subr.mxu0 0.0
      %572 = vmatpush1.msra.mxu0 0.0
      %573 = vmatprep.subr.mxu0 0.0
      %574 = vmatpush1.msra.mxu0 0.0
      %575 = vmatprep.subr.mxu0 0.0
      %576 = vmatpush1.msra.mxu0 0.0
      %577 = vmatprep.subr.mxu0 0.0
      %578 = vmatpush1.msra.mxu0 0.0
      %579 = vmatprep.subr.mxu0 0.0
      %580 = vmatpush1.msra.mxu0 0.0
      %581 = vmatprep.subr.mxu0 0.0
      %582 = vmatpush1.msra.mxu0 0.0
      %583 = vmatprep.subr.mxu0 0.0
      %584 = vmatpush1.msra.mxu0 0.0
      %585 = vmatprep.subr.mxu0 0.0
      %586 = vmatpush1.msra.mxu0 0.0
      %587 = vmatprep.subr.mxu0 0.0
      %588 = vmatpush1.msra.mxu0 0.0
      %589 = vmatprep.subr.mxu0 0.0
      %590 = vmatpush1.msra.mxu0 0.0
      %591 = vmatprep.subr.mxu0 0.0
      %592 = vmatpush1.msra.mxu0 0.0
      %593 = vmatprep.subr.mxu0 0.0
      %594 = vmatpush1.msra.mxu0 0.0
      %595 = vmatprep.subr.mxu0 0.0
      %596 = vmatpush1.msra.mxu0 0.0
      %597 = vmatprep.subr.mxu0 0.0
      %598 = vmatpush1.msra.mxu0 0.0
      %599 = vmatprep.subr.mxu0 0.0
      %600 = vmatpush1.msra.mxu0 0.0
      %601 = vmatprep.mubr.f32.mxu0 0.0
      %v602 = vand.u32 %v47, 4294901760
      %603 = vmatmul.mubr.f32.gmra.mrb[0].mxu0 %v602
      %v604 = vpop.f32.mrb[0].mxu0
      %v605 = vadd.f32 %v486, %v604
      %v606 = vpop.f32.mrb[0].mxu0
      %607 = vdwg.mxu0
      %608 = vmatprep.subr.mxu0 0.0
      %v609 = vand.u32 %v27, 4294901760
      %610 = vmatpush1.msra.mxu0 %v609
      %611 = vmatprep.subr.mxu0 0.0
      %v612 = vand.u32 %v28, 4294901760
      %613 = vmatpush1.msra.mxu0 %v612
      %614 = vmatprep.subr.mxu0 0.0
      %v615 = vand.u32 %v29, 4294901760
      %616 = vmatpush1.msra.mxu0 %v615
      %617 = vmatprep.subr.mxu0 0.0
      %v618 = vand.u32 %v30, 4294901760
      %619 = vmatpush1.msra.mxu0 %v618
      %620 = vmatprep.subr.mxu0 0.0
      %v621 = vand.u32 %v31, 4294901760
      %622 = vmatpush1.msra.mxu0 %v621
      %623 = vmatprep.subr.mxu0 0.0
      %v624 = vand.u32 %v32, 4294901760
      %625 = vmatpush1.msra.mxu0 %v624
      %626 = vmatprep.subr.mxu0 0.0
      %v627 = vand.u32 %v33, 4294901760
      %628 = vmatpush1.msra.mxu0 %v627
      %629 = vmatprep.subr.mxu0 0.0
      %v630 = vand.u32 %v34, 4294901760
      %631 = vmatpush1.msra.mxu0 %v630
      %632 = vmatprep.subr.mxu0 0.0
      %v633 = vand.u32 %v35, 4294901760
      %634 = vmatpush1.msra.mxu0 %v633
      %635 = vmatprep.subr.mxu0 0.0
      %v636 = vand.u32 %v36, 4294901760
      %637 = vmatpush1.msra.mxu0 %v636
      %638 = vmatprep.subr.mxu0 0.0
      %v639 = vand.u32 %v37, 4294901760
      %640 = vmatpush1.msra.mxu0 %v639
      %641 = vmatprep.subr.mxu0 0.0
      %v642 = vand.u32 %v38, 4294901760
      %643 = vmatpush1.msra.mxu0 %v642
      %644 = vmatprep.subr.mxu0 0.0
      %v645 = vand.u32 %v39, 4294901760
      %646 = vmatpush1.msra.mxu0 %v645
      %647 = vmatprep.subr.mxu0 0.0
      %v648 = vand.u32 %v40, 4294901760
      %649 = vmatpush1.msra.mxu0 %v648
      %650 = vmatprep.subr.mxu0 0.0
      %v651 = vand.u32 %v41, 4294901760
      %652 = vmatpush1.msra.mxu0 %v651
      %653 = vmatprep.subr.mxu0 0.0
      %v654 = vand.u32 %v42, 4294901760
      %655 = vmatpush1.msra.mxu0 %v654
      %656 = vmatprep.subr.mxu0 0.0
      %657 = vmatpush1.msra.mxu0 0.0
      %658 = vmatprep.subr.mxu0 0.0
      %659 = vmatpush1.msra.mxu0 0.0
      %660 = vmatprep.subr.mxu0 0.0
      %661 = vmatpush1.msra.mxu0 0.0
      %662 = vmatprep.subr.mxu0 0.0
      %663 = vmatpush1.msra.mxu0 0.0
      %664 = vmatprep.subr.mxu0 0.0
      %665 = vmatpush1.msra.mxu0 0.0
      %666 = vmatprep.subr.mxu0 0.0
      %667 = vmatpush1.msra.mxu0 0.0
      %668 = vmatprep.subr.mxu0 0.0
      %669 = vmatpush1.msra.mxu0 0.0
      %670 = vmatprep.subr.mxu0 0.0
      %671 = vmatpush1.msra.mxu0 0.0
      %672 = vmatprep.subr.mxu0 0.0
      %673 = vmatpush1.msra.mxu0 0.0
      %674 = vmatprep.subr.mxu0 0.0
      %675 = vmatpush1.msra.mxu0 0.0
      %676 = vmatprep.subr.mxu0 0.0
      %677 = vmatpush1.msra.mxu0 0.0
      %678 = vmatprep.subr.mxu0 0.0
      %679 = vmatpush1.msra.mxu0 0.0
      %680 = vmatprep.subr.mxu0 0.0
      %681 = vmatpush1.msra.mxu0 0.0
      %682 = vmatprep.subr.mxu0 0.0
      %683 = vmatpush1.msra.mxu0 0.0
      %684 = vmatprep.subr.mxu0 0.0
      %685 = vmatpush1.msra.mxu0 0.0
      %686 = vmatprep.subr.mxu0 0.0
      %687 = vmatpush1.msra.mxu0 0.0
      %688 = vmatprep.mubr.f32.mxu0 0.0
      %v689 = vand.u32 %v47, 4294901760
      %690 = vmatmul.mubr.f32.gmra.mrb[0].mxu0 %v689
      %v691 = vpop.f32.mrb[0].mxu0
      %v692 = vadd.f32 %v605, %v691
      %v693 = vpop.f32.mrb[0].mxu0
      %694 = vdwg.mxu0
      %695 = vmatprep.subr.mxu0 0.0
      %v696 = vand.u32 %v27, 4294901760
      %697 = vmatpush1.msra.mxu0 %v696
      %698 = vmatprep.subr.mxu0 0.0
      %v699 = vand.u32 %v28, 4294901760
      %700 = vmatpush1.msra.mxu0 %v699
      %701 = vmatprep.subr.mxu0 0.0
      %v702 = vand.u32 %v29, 4294901760
      %703 = vmatpush1.msra.mxu0 %v702
      %704 = vmatprep.subr.mxu0 0.0
      %v705 = vand.u32 %v30, 4294901760
      %706 = vmatpush1.msra.mxu0 %v705
      %707 = vmatprep.subr.mxu0 0.0
      %v708 = vand.u32 %v31, 4294901760
      %709 = vmatpush1.msra.mxu0 %v708
      %710 = vmatprep.subr.mxu0 0.0
      %v711 = vand.u32 %v32, 4294901760
      %712 = vmatpush1.msra.mxu0 %v711
      %713 = vmatprep.subr.mxu0 0.0
      %v714 = vand.u32 %v33, 4294901760
      %715 = vmatpush1.msra.mxu0 %v714
      %716 = vmatprep.subr.mxu0 0.0
      %v717 = vand.u32 %v34, 4294901760
      %718 = vmatpush1.msra.mxu0 %v717
      %719 = vmatprep.subr.mxu0 0.0
      %v720 = vand.u32 %v35, 4294901760
      %721 = vmatpush1.msra.mxu0 %v720
      %722 = vmatprep.subr.mxu0 0.0
      %v723 = vand.u32 %v36, 4294901760
      %724 = vmatpush1.msra.mxu0 %v723
      %725 = vmatprep.subr.mxu0 0.0
      %v726 = vand.u32 %v37, 4294901760
      %727 = vmatpush1.msra.mxu0 %v726
      %728 = vmatprep.subr.mxu0 0.0
      %v729 = vand.u32 %v38, 4294901760
      %730 = vmatpush1.msra.mxu0 %v729
      %731 = vmatprep.subr.mxu0 0.0
      %v732 = vand.u32 %v39, 4294901760
      %733 = vmatpush1.msra.mxu0 %v732
      %734 = vmatprep.subr.mxu0 0.0
      %v735 = vand.u32 %v40, 4294901760
      %736 = vmatpush1.msra.mxu0 %v735
      %737 = vmatprep.subr.mxu0 0.0
      %v738 = vand.u32 %v41, 4294901760
      %739 = vmatpush1.msra.mxu0 %v738
      %740 = vmatprep.subr.mxu0 0.0
      %v741 = vand.u32 %v42, 4294901760
      %742 = vmatpush1.msra.mxu0 %v741
      %743 = vmatprep.subr.mxu0 0.0
      %744 = vmatpush1.msra.mxu0 0.0
      %745 = vmatprep.subr.mxu0 0.0
      %746 = vmatpush1.msra.mxu0 0.0
      %747 = vmatprep.subr.mxu0 0.0
      %748 = vmatpush1.msra.mxu0 0.0
      %749 = vmatprep.subr.mxu0 0.0
      %750 = vmatpush1.msra.mxu0 0.0
      %751 = vmatprep.subr.mxu0 0.0
      %752 = vmatpush1.msra.mxu0 0.0
      %753 = vmatprep.subr.mxu0 0.0
      %754 = vmatpush1.msra.mxu0 0.0
      %755 = vmatprep.subr.mxu0 0.0
      %756 = vmatpush1.msra.mxu0 0.0
      %757 = vmatprep.subr.mxu0 0.0
      %758 = vmatpush1.msra.mxu0 0.0
      %759 = vmatprep.subr.mxu0 0.0
      %760 = vmatpush1.msra.mxu0 0.0
      %761 = vmatprep.subr.mxu0 0.0
      %762 = vmatpush1.msra.mxu0 0.0
      %763 = vmatprep.subr.mxu0 0.0
      %764 = vmatpush1.msra.mxu0 0.0
      %765 = vmatprep.subr.mxu0 0.0
      %766 = vmatpush1.msra.mxu0 0.0
      %767 = vmatprep.subr.mxu0 0.0
      %768 = vmatpush1.msra.mxu0 0.0
      %769 = vmatprep.subr.mxu0 0.0
      %770 = vmatpush1.msra.mxu0 0.0
      %771 = vmatprep.subr.mxu0 0.0
      %772 = vmatpush1.msra.mxu0 0.0
      %773 = vmatprep.subr.mxu0 0.0
      %774 = vmatpush1.msra.mxu0 0.0
      %775 = vmatprep.mubr.f32.mxu0 0.0
      %v776 = vand.u32 %v692, 4294901760
      %v777 = vsub.f32 %v692, %v776
      %v778 = vand.u32 %v777, 4294901760
      %v779 = vsub.f32 %v777, %v778
      %v780 = vand.u32 %v779, 4294901760
      %781 = vmatmul.mubr.f32.gmra.mrb[0].mxu0 %v780
      %v782 = vpop.f32.mrb[0].mxu0
      %v783 = vadd.f32 %v43, %v782
      %v784 = vpop.f32.mrb[0].mxu0
      %785 = vdwg.mxu0
      %786 = vmatprep.subr.mxu0 0.0
      %v787 = vand.u32 %v27, 4294901760
      %v788 = vsub.f32 %v27, %v787
      %v789 = vand.u32 %v788, 4294901760
      %v790 = vsub.f32 %v788, %v789
      %v791 = vand.u32 %v790, 4294901760
      %792 = vmatpush1.msra.mxu0 %v791
      %793 = vmatprep.subr.mxu0 0.0
      %v794 = vand.u32 %v28, 4294901760
      %v795 = vsub.f32 %v28, %v794
      %v796 = vand.u32 %v795, 4294901760
      %v797 = vsub.f32 %v795, %v796
      %v798 = vand.u32 %v797, 4294901760
      %799 = vmatpush1.msra.mxu0 %v798
      %800 = vmatprep.subr.mxu0 0.0
      %v801 = vand.u32 %v29, 4294901760
      %v802 = vsub.f32 %v29, %v801
      %v803 = vand.u32 %v802, 4294901760
      %v804 = vsub.f32 %v802, %v803
      %v805 = vand.u32 %v804, 4294901760
      %806 = vmatpush1.msra.mxu0 %v805
      %807 = vmatprep.subr.mxu0 0.0
      %v808 = vand.u32 %v30, 4294901760
      %v809 = vsub.f32 %v30, %v808
      %v810 = vand.u32 %v809, 4294901760
      %v811 = vsub.f32 %v809, %v810
      %v812 = vand.u32 %v811, 4294901760
      %813 = vmatpush1.msra.mxu0 %v812
      %814 = vmatprep.subr.mxu0 0.0
      %v815 = vand.u32 %v31, 4294901760
      %v816 = vsub.f32 %v31, %v815
      %v817 = vand.u32 %v816, 4294901760
      %v818 = vsub.f32 %v816, %v817
      %v819 = vand.u32 %v818, 4294901760
      %820 = vmatpush1.msra.mxu0 %v819
      %821 = vmatprep.subr.mxu0 0.0
      %v822 = vand.u32 %v32, 4294901760
      %v823 = vsub.f32 %v32, %v822
      %v824 = vand.u32 %v823, 4294901760
      %v825 = vsub.f32 %v823, %v824
      %v826 = vand.u32 %v825, 4294901760
      %827 = vmatpush1.msra.mxu0 %v826
      %828 = vmatprep.subr.mxu0 0.0
      %v829 = vand.u32 %v33, 4294901760
      %v830 = vsub.f32 %v33, %v829
      %v831 = vand.u32 %v830, 4294901760
      %v832 = vsub.f32 %v830, %v831
      %v833 = vand.u32 %v832, 4294901760
      %834 = vmatpush1.msra.mxu0 %v833
      %835 = vmatprep.subr.mxu0 0.0
      %v836 = vand.u32 %v34, 4294901760
      %v837 = vsub.f32 %v34, %v836
      %v838 = vand.u32 %v837, 4294901760
      %v839 = vsub.f32 %v837, %v838
      %v840 = vand.u32 %v839, 4294901760
      %841 = vmatpush1.msra.mxu0 %v840
      %842 = vmatprep.subr.mxu0 0.0
      %v843 = vand.u32 %v35, 4294901760
      %v844 = vsub.f32 %v35, %v843
      %v845 = vand.u32 %v844, 4294901760
      %v846 = vsub.f32 %v844, %v845
      %v847 = vand.u32 %v846, 4294901760
      %848 = vmatpush1.msra.mxu0 %v847
      %849 = vmatprep.subr.mxu0 0.0
      %v850 = vand.u32 %v36, 4294901760
      %v851 = vsub.f32 %v36, %v850
      %v852 = vand.u32 %v851, 4294901760
      %v853 = vsub.f32 %v851, %v852
      %v854 = vand.u32 %v853, 4294901760
      %855 = vmatpush1.msra.mxu0 %v854
      %856 = vmatprep.subr.mxu0 0.0
      %v857 = vand.u32 %v37, 4294901760
      %v858 = vsub.f32 %v37, %v857
      %v859 = vand.u32 %v858, 4294901760
      %v860 = vsub.f32 %v858, %v859
      %v861 = vand.u32 %v860, 4294901760
      %862 = vmatpush1.msra.mxu0 %v861
      %863 = vmatprep.subr.mxu0 0.0
      %v864 = vand.u32 %v38, 4294901760
      %v865 = vsub.f32 %v38, %v864
      %v866 = vand.u32 %v865, 4294901760
      %v867 = vsub.f32 %v865, %v866
      %v868 = vand.u32 %v867, 4294901760
      %869 = vmatpush1.msra.mxu0 %v868
      %870 = vmatprep.subr.mxu0 0.0
      %v871 = vand.u32 %v39, 4294901760
      %v872 = vsub.f32 %v39, %v871
      %v873 = vand.u32 %v872, 4294901760
      %v874 = vsub.f32 %v872, %v873
      %v875 = vand.u32 %v874, 4294901760
      %876 = vmatpush1.msra.mxu0 %v875
      %877 = vmatprep.subr.mxu0 0.0
      %v878 = vand.u32 %v40, 4294901760
      %v879 = vsub.f32 %v40, %v878
      %v880 = vand.u32 %v879, 4294901760
      %v881 = vsub.f32 %v879, %v880
      %v882 = vand.u32 %v881, 4294901760
      %883 = vmatpush1.msra.mxu0 %v882
      %884 = vmatprep.subr.mxu0 0.0
      %v885 = vand.u32 %v41, 4294901760
      %v886 = vsub.f32 %v41, %v885
      %v887 = vand.u32 %v886, 4294901760
      %v888 = vsub.f32 %v886, %v887
      %v889 = vand.u32 %v888, 4294901760
      %890 = vmatpush1.msra.mxu0 %v889
      %891 = vmatprep.subr.mxu0 0.0
      %v892 = vand.u32 %v42, 4294901760
      %v893 = vsub.f32 %v42, %v892
      %v894 = vand.u32 %v893, 4294901760
      %v895 = vsub.f32 %v893, %v894
      %v896 = vand.u32 %v895, 4294901760
      %897 = vmatpush1.msra.mxu0 %v896
      %898 = vmatprep.subr.mxu0 0.0
      %899 = vmatpush1.msra.mxu0 0.0
      %900 = vmatprep.subr.mxu0 0.0
      %901 = vmatpush1.msra.mxu0 0.0
      %902 = vmatprep.subr.mxu0 0.0
      %903 = vmatpush1.msra.mxu0 0.0
      %904 = vmatprep.subr.mxu0 0.0
      %905 = vmatpush1.msra.mxu0 0.0
      %906 = vmatprep.subr.mxu0 0.0
      %907 = vmatpush1.msra.mxu0 0.0
      %908 = vmatprep.subr.mxu0 0.0
      %909 = vmatpush1.msra.mxu0 0.0
      %910 = vmatprep.subr.mxu0 0.0
      %911 = vmatpush1.msra.mxu0 0.0
      %912 = vmatprep.subr.mxu0 0.0
      %913 = vmatpush1.msra.mxu0 0.0
      %914 = vmatprep.subr.mxu0 0.0
      %915 = vmatpush1.msra.mxu0 0.0
      %916 = vmatprep.subr.mxu0 0.0
      %917 = vmatpush1.msra.mxu0 0.0
      %918 = vmatprep.subr.mxu0 0.0
      %919 = vmatpush1.msra.mxu0 0.0
      %920 = vmatprep.subr.mxu0 0.0
      %921 = vmatpush1.msra.mxu0 0.0
      %922 = vmatprep.subr.mxu0 0.0
      %923 = vmatpush1.msra.mxu0 0.0
      %924 = vmatprep.subr.mxu0 0.0
      %925 = vmatpush1.msra.mxu0 0.0
      %926 = vmatprep.subr.mxu0 0.0
      %927 = vmatpush1.msra.mxu0 0.0
      %928 = vmatprep.subr.mxu0 0.0
      %929 = vmatpush1.msra.mxu0 0.0
      %930 = vmatprep.mubr.f32.mxu0 0.0
      %v931 = vand.u32 %v692, 4294901760
      %932 = vmatmul.mubr.f32.gmra.mrb[0].mxu0 %v931
      %v933 = vpop.f32.mrb[0].mxu0
      %v934 = vadd.f32 %v783, %v933
      %v935 = vpop.f32.mrb[0].mxu0
      %936 = vdwg.mxu0
      %937 = vmatprep.subr.mxu0 0.0
      %v938 = vand.u32 %v27, 4294901760
      %v939 = vsub.f32 %v27, %v938
      %940 = vmatpush1.msra.mxu0 %v939
      %941 = vmatprep.subr.mxu0 0.0
      %v942 = vand.u32 %v28, 4294901760
      %v943 = vsub.f32 %v28, %v942
      %944 = vmatpush1.msra.mxu0 %v943
      %945 = vmatprep.subr.mxu0 0.0
      %v946 = vand.u32 %v29, 4294901760
      %v947 = vsub.f32 %v29, %v946
      %948 = vmatpush1.msra.mxu0 %v947
      %949 = vmatprep.subr.mxu0 0.0
      %v950 = vand.u32 %v30, 4294901760
      %v951 = vsub.f32 %v30, %v950
      %952 = vmatpush1.msra.mxu0 %v951
      %953 = vmatprep.subr.mxu0 0.0
      %v954 = vand.u32 %v31, 4294901760
      %v955 = vsub.f32 %v31, %v954
      %956 = vmatpush1.msra.mxu0 %v955
      %957 = vmatprep.subr.mxu0 0.0
      %v958 = vand.u32 %v32, 4294901760
      %v959 = vsub.f32 %v32, %v958
      %960 = vmatpush1.msra.mxu0 %v959
      %961 = vmatprep.subr.mxu0 0.0
      %v962 = vand.u32 %v33, 4294901760
      %v963 = vsub.f32 %v33, %v962
      %964 = vmatpush1.msra.mxu0 %v963
      %965 = vmatprep.subr.mxu0 0.0
      %v966 = vand.u32 %v34, 4294901760
      %v967 = vsub.f32 %v34, %v966
      %968 = vmatpush1.msra.mxu0 %v967
      %969 = vmatprep.subr.mxu0 0.0
      %v970 = vand.u32 %v35, 4294901760
      %v971 = vsub.f32 %v35, %v970
      %972 = vmatpush1.msra.mxu0 %v971
      %973 = vmatprep.subr.mxu0 0.0
      %v974 = vand.u32 %v36, 4294901760
      %v975 = vsub.f32 %v36, %v974
      %976 = vmatpush1.msra.mxu0 %v975
      %977 = vmatprep.subr.mxu0 0.0
      %v978 = vand.u32 %v37, 4294901760
      %v979 = vsub.f32 %v37, %v978
      %980 = vmatpush1.msra.mxu0 %v979
      %981 = vmatprep.subr.mxu0 0.0
      %v982 = vand.u32 %v38, 4294901760
      %v983 = vsub.f32 %v38, %v982
      %984 = vmatpush1.msra.mxu0 %v983
      %985 = vmatprep.subr.mxu0 0.0
      %v986 = vand.u32 %v39, 4294901760
      %v987 = vsub.f32 %v39, %v986
      %988 = vmatpush1.msra.mxu0 %v987
      %989 = vmatprep.subr.mxu0 0.0
      %v990 = vand.u32 %v40, 4294901760
      %v991 = vsub.f32 %v40, %v990
      %992 = vmatpush1.msra.mxu0 %v991
      %993 = vmatprep.subr.mxu0 0.0
      %v994 = vand.u32 %v41, 4294901760
      %v995 = vsub.f32 %v41, %v994
      %996 = vmatpush1.msra.mxu0 %v995
      %997 = vmatprep.subr.mxu0 0.0
      %v998 = vand.u32 %v42, 4294901760
      %v999 = vsub.f32 %v42, %v998
      %1000 = vmatpush1.msra.mxu0 %v999
      %1001 = vmatprep.subr.mxu0 0.0
      %1002 = vmatpush1.msra.mxu0 0.0
      %1003 = vmatprep.subr.mxu0 0.0
      %1004 = vmatpush1.msra.mxu0 0.0
      %1005 = vmatprep.subr.mxu0 0.0
      %1006 = vmatpush1.msra.mxu0 0.0
      %1007 = vmatprep.subr.mxu0 0.0
      %1008 = vmatpush1.msra.mxu0 0.0
      %1009 = vmatprep.subr.mxu0 0.0
      %1010 = vmatpush1.msra.mxu0 0.0
      %1011 = vmatprep.subr.mxu0 0.0
      %1012 = vmatpush1.msra.mxu0 0.0
      %1013 = vmatprep.subr.mxu0 0.0
      %1014 = vmatpush1.msra.mxu0 0.0
      %1015 = vmatprep.subr.mxu0 0.0
      %1016 = vmatpush1.msra.mxu0 0.0
      %1017 = vmatprep.subr.mxu0 0.0
      %1018 = vmatpush1.msra.mxu0 0.0
      %1019 = vmatprep.subr.mxu0 0.0
      %1020 = vmatpush1.msra.mxu0 0.0
      %1021 = vmatprep.subr.mxu0 0.0
      %1022 = vmatpush1.msra.mxu0 0.0
      %1023 = vmatprep.subr.mxu0 0.0
      %1024 = vmatpush1.msra.mxu0 0.0
      %1025 = vmatprep.subr.mxu0 0.0
      %1026 = vmatpush1.msra.mxu0 0.0
      %1027 = vmatprep.subr.mxu0 0.0
      %1028 = vmatpush1.msra.mxu0 0.0
      %1029 = vmatprep.subr.mxu0 0.0
      %1030 = vmatpush1.msra.mxu0 0.0
      %1031 = vmatprep.subr.mxu0 0.0
      %1032 = vmatpush1.msra.mxu0 0.0
      %1033 = vmatprep.mubr.f32.mxu0 0.0
      %v1034 = vand.u32 %v692, 4294901760
      %v1035 = vsub.f32 %v692, %v1034
      %1036 = vmatmul.mubr.f32.gmra.mrb[0].mxu0 %v1035
      %v1037 = vpop.f32.mrb[0].mxu0
      %v1038 = vadd.f32 %v934, %v1037
      %v1039 = vpop.f32.mrb[0].mxu0
      %1040 = vdwg.mxu0
      %1041 = vmatprep.subr.mxu0 0.0
      %v1042 = vand.u32 %v27, 4294901760
      %1043 = vmatpush1.msra.mxu0 %v1042
      %1044 = vmatprep.subr.mxu0 0.0
      %v1045 = vand.u32 %v28, 4294901760
      %1046 = vmatpush1.msra.mxu0 %v1045
      %1047 = vmatprep.subr.mxu0 0.0
      %v1048 = vand.u32 %v29, 4294901760
      %1049 = vmatpush1.msra.mxu0 %v1048
      %1050 = vmatprep.subr.mxu0 0.0
      %v1051 = vand.u32 %v30, 4294901760
      %1052 = vmatpush1.msra.mxu0 %v1051
      %1053 = vmatprep.subr.mxu0 0.0
      %v1054 = vand.u32 %v31, 4294901760
      %1055 = vmatpush1.msra.mxu0 %v1054
      %1056 = vmatprep.subr.mxu0 0.0
      %v1057 = vand.u32 %v32, 4294901760
      %1058 = vmatpush1.msra.mxu0 %v1057
      %1059 = vmatprep.subr.mxu0 0.0
      %v1060 = vand.u32 %v33, 4294901760
      %1061 = vmatpush1.msra.mxu0 %v1060
      %1062 = vmatprep.subr.mxu0 0.0
      %v1063 = vand.u32 %v34, 4294901760
      %1064 = vmatpush1.msra.mxu0 %v1063
      %1065 = vmatprep.subr.mxu0 0.0
      %v1066 = vand.u32 %v35, 4294901760
      %1067 = vmatpush1.msra.mxu0 %v1066
      %1068 = vmatprep.subr.mxu0 0.0
      %v1069 = vand.u32 %v36, 4294901760
      %1070 = vmatpush1.msra.mxu0 %v1069
      %1071 = vmatprep.subr.mxu0 0.0
      %v1072 = vand.u32 %v37, 4294901760
      %1073 = vmatpush1.msra.mxu0 %v1072
      %1074 = vmatprep.subr.mxu0 0.0
      %v1075 = vand.u32 %v38, 4294901760
      %1076 = vmatpush1.msra.mxu0 %v1075
      %1077 = vmatprep.subr.mxu0 0.0
      %v1078 = vand.u32 %v39, 4294901760
      %1079 = vmatpush1.msra.mxu0 %v1078
      %1080 = vmatprep.subr.mxu0 0.0
      %v1081 = vand.u32 %v40, 4294901760
      %1082 = vmatpush1.msra.mxu0 %v1081
      %1083 = vmatprep.subr.mxu0 0.0
      %v1084 = vand.u32 %v41, 4294901760
      %1085 = vmatpush1.msra.mxu0 %v1084
      %1086 = vmatprep.subr.mxu0 0.0
      %v1087 = vand.u32 %v42, 4294901760
      %1088 = vmatpush1.msra.mxu0 %v1087
      %1089 = vmatprep.subr.mxu0 0.0
      %1090 = vmatpush1.msra.mxu0 0.0
      %1091 = vmatprep.subr.mxu0 0.0
      %1092 = vmatpush1.msra.mxu0 0.0
      %1093 = vmatprep.subr.mxu0 0.0
      %1094 = vmatpush1.msra.mxu0 0.0
      %1095 = vmatprep.subr.mxu0 0.0
      %1096 = vmatpush1.msra.mxu0 0.0
      %1097 = vmatprep.subr.mxu0 0.0
      %1098 = vmatpush1.msra.mxu0 0.0
      %1099 = vmatprep.subr.mxu0 0.0
      %1100 = vmatpush1.msra.mxu0 0.0
      %1101 = vmatprep.subr.mxu0 0.0
      %1102 = vmatpush1.msra.mxu0 0.0
      %1103 = vmatprep.subr.mxu0 0.0
      %1104 = vmatpush1.msra.mxu0 0.0
      %1105 = vmatprep.subr.mxu0 0.0
      %1106 = vmatpush1.msra.mxu0 0.0
      %1107 = vmatprep.subr.mxu0 0.0
      %1108 = vmatpush1.msra.mxu0 0.0
      %1109 = vmatprep.subr.mxu0 0.0
      %1110 = vmatpush1.msra.mxu0 0.0
      %1111 = vmatprep.subr.mxu0 0.0
      %1112 = vmatpush1.msra.mxu0 0.0
      %1113 = vmatprep.subr.mxu0 0.0
      %1114 = vmatpush1.msra.mxu0 0.0
      %1115 = vmatprep.subr.mxu0 0.0
      %1116 = vmatpush1.msra.mxu0 0.0
      %1117 = vmatprep.subr.mxu0 0.0
      %1118 = vmatpush1.msra.mxu0 0.0
      %1119 = vmatprep.subr.mxu0 0.0
      %1120 = vmatpush1.msra.mxu0 0.0
      %1121 = vmatprep.mubr.f32.mxu0 0.0
      %v1122 = vand.u32 %v692, 4294901760
      %v1123 = vsub.f32 %v692, %v1122
      %v1124 = vand.u32 %v1123, 4294901760
      %1125 = vmatmul.mubr.f32.gmra.mrb[0].mxu0 %v1124
      %v1126 = vpop.f32.mrb[0].mxu0
      %v1127 = vadd.f32 %v1038, %v1126
      %v1128 = vpop.f32.mrb[0].mxu0
      %1129 = vdwg.mxu0
      %1130 = vmatprep.subr.mxu0 0.0
      %v1131 = vand.u32 %v27, 4294901760
      %v1132 = vsub.f32 %v27, %v1131
      %v1133 = vand.u32 %v1132, 4294901760
      %1134 = vmatpush1.msra.mxu0 %v1133
      %1135 = vmatprep.subr.mxu0 0.0
      %v1136 = vand.u32 %v28, 4294901760
      %v1137 = vsub.f32 %v28, %v1136
      %v1138 = vand.u32 %v1137, 4294901760
      %1139 = vmatpush1.msra.mxu0 %v1138
      %1140 = vmatprep.subr.mxu0 0.0
      %v1141 = vand.u32 %v29, 4294901760
      %v1142 = vsub.f32 %v29, %v1141
      %v1143 = vand.u32 %v1142, 4294901760
      %1144 = vmatpush1.msra.mxu0 %v1143
      %1145 = vmatprep.subr.mxu0 0.0
      %v1146 = vand.u32 %v30, 4294901760
      %v1147 = vsub.f32 %v30, %v1146
      %v1148 = vand.u32 %v1147, 4294901760
      %1149 = vmatpush1.msra.mxu0 %v1148
      %1150 = vmatprep.subr.mxu0 0.0
      %v1151 = vand.u32 %v31, 4294901760
      %v1152 = vsub.f32 %v31, %v1151
      %v1153 = vand.u32 %v1152, 4294901760
      %1154 = vmatpush1.msra.mxu0 %v1153
      %1155 = vmatprep.subr.mxu0 0.0
      %v1156 = vand.u32 %v32, 4294901760
      %v1157 = vsub.f32 %v32, %v1156
      %v1158 = vand.u32 %v1157, 4294901760
      %1159 = vmatpush1.msra.mxu0 %v1158
      %1160 = vmatprep.subr.mxu0 0.0
      %v1161 = vand.u32 %v33, 4294901760
      %v1162 = vsub.f32 %v33, %v1161
      %v1163 = vand.u32 %v1162, 4294901760
      %1164 = vmatpush1.msra.mxu0 %v1163
      %1165 = vmatprep.subr.mxu0 0.0
      %v1166 = vand.u32 %v34, 4294901760
      %v1167 = vsub.f32 %v34, %v1166
      %v1168 = vand.u32 %v1167, 4294901760
      %1169 = vmatpush1.msra.mxu0 %v1168
      %1170 = vmatprep.subr.mxu0 0.0
      %v1171 = vand.u32 %v35, 4294901760
      %v1172 = vsub.f32 %v35, %v1171
      %v1173 = vand.u32 %v1172, 4294901760
      %1174 = vmatpush1.msra.mxu0 %v1173
      %1175 = vmatprep.subr.mxu0 0.0
      %v1176 = vand.u32 %v36, 4294901760
      %v1177 = vsub.f32 %v36, %v1176
      %v1178 = vand.u32 %v1177, 4294901760
      %1179 = vmatpush1.msra.mxu0 %v1178
      %1180 = vmatprep.subr.mxu0 0.0
      %v1181 = vand.u32 %v37, 4294901760
      %v1182 = vsub.f32 %v37, %v1181
      %v1183 = vand.u32 %v1182, 4294901760
      %1184 = vmatpush1.msra.mxu0 %v1183
      %1185 = vmatprep.subr.mxu0 0.0
      %v1186 = vand.u32 %v38, 4294901760
      %v1187 = vsub.f32 %v38, %v1186
      %v1188 = vand.u32 %v1187, 4294901760
      %1189 = vmatpush1.msra.mxu0 %v1188
      %1190 = vmatprep.subr.mxu0 0.0
      %v1191 = vand.u32 %v39, 4294901760
      %v1192 = vsub.f32 %v39, %v1191
      %v1193 = vand.u32 %v1192, 4294901760
      %1194 = vmatpush1.msra.mxu0 %v1193
      %1195 = vmatprep.subr.mxu0 0.0
      %v1196 = vand.u32 %v40, 4294901760
      %v1197 = vsub.f32 %v40, %v1196
      %v1198 = vand.u32 %v1197, 4294901760
      %1199 = vmatpush1.msra.mxu0 %v1198
      %1200 = vmatprep.subr.mxu0 0.0
      %v1201 = vand.u32 %v41, 4294901760
      %v1202 = vsub.f32 %v41, %v1201
      %v1203 = vand.u32 %v1202, 4294901760
      %1204 = vmatpush1.msra.mxu0 %v1203
      %1205 = vmatprep.subr.mxu0 0.0
      %v1206 = vand.u32 %v42, 4294901760
      %v1207 = vsub.f32 %v42, %v1206
      %v1208 = vand.u32 %v1207, 4294901760
      %1209 = vmatpush1.msra.mxu0 %v1208
      %1210 = vmatprep.subr.mxu0 0.0
      %1211 = vmatpush1.msra.mxu0 0.0
      %1212 = vmatprep.subr.mxu0 0.0
      %1213 = vmatpush1.msra.mxu0 0.0
      %1214 = vmatprep.subr.mxu0 0.0
      %1215 = vmatpush1.msra.mxu0 0.0
      %1216 = vmatprep.subr.mxu0 0.0
      %1217 = vmatpush1.msra.mxu0 0.0
      %1218 = vmatprep.subr.mxu0 0.0
      %1219 = vmatpush1.msra.mxu0 0.0
      %1220 = vmatprep.subr.mxu0 0.0
      %1221 = vmatpush1.msra.mxu0 0.0
      %1222 = vmatprep.subr.mxu0 0.0
      %1223 = vmatpush1.msra.mxu0 0.0
      %1224 = vmatprep.subr.mxu0 0.0
      %1225 = vmatpush1.msra.mxu0 0.0
      %1226 = vmatprep.subr.mxu0 0.0
      %1227 = vmatpush1.msra.mxu0 0.0
      %1228 = vmatprep.subr.mxu0 0.0
      %1229 = vmatpush1.msra.mxu0 0.0
      %1230 = vmatprep.subr.mxu0 0.0
      %1231 = vmatpush1.msra.mxu0 0.0
      %1232 = vmatprep.subr.mxu0 0.0
      %1233 = vmatpush1.msra.mxu0 0.0
      %1234 = vmatprep.subr.mxu0 0.0
      %1235 = vmatpush1.msra.mxu0 0.0
      %1236 = vmatprep.subr.mxu0 0.0
      %1237 = vmatpush1.msra.mxu0 0.0
      %1238 = vmatprep.subr.mxu0 0.0
      %1239 = vmatpush1.msra.mxu0 0.0
      %1240 = vmatprep.subr.mxu0 0.0
      %1241 = vmatpush1.msra.mxu0 0.0
      %1242 = vmatprep.mubr.f32.mxu0 0.0
      %v1243 = vand.u32 %v692, 4294901760
      %1244 = vmatmul.mubr.f32.gmra.mrb[0].mxu0 %v1243
      %v1245 = vpop.f32.mrb[0].mxu0
      %v1246 = vadd.f32 %v1127, %v1245
      %v1247 = vpop.f32.mrb[0].mxu0
      %1248 = vdwg.mxu0
      %1249 = vmatprep.subr.mxu0 0.0
      %v1250 = vand.u32 %v27, 4294901760
      %1251 = vmatpush1.msra.mxu0 %v1250
      %1252 = vmatprep.subr.mxu0 0.0
      %v1253 = vand.u32 %v28, 4294901760
      %1254 = vmatpush1.msra.mxu0 %v1253
      %1255 = vmatprep.subr.mxu0 0.0
      %v1256 = vand.u32 %v29, 4294901760
      %1257 = vmatpush1.msra.mxu0 %v1256
      %1258 = vmatprep.subr.mxu0 0.0
      %v1259 = vand.u32 %v30, 4294901760
      %1260 = vmatpush1.msra.mxu0 %v1259
      %1261 = vmatprep.subr.mxu0 0.0
      %v1262 = vand.u32 %v31, 4294901760
      %1263 = vmatpush1.msra.mxu0 %v1262
      %1264 = vmatprep.subr.mxu0 0.0
      %v1265 = vand.u32 %v32, 4294901760
      %1266 = vmatpush1.msra.mxu0 %v1265
      %1267 = vmatprep.subr.mxu0 0.0
      %v1268 = vand.u32 %v33, 4294901760
      %1269 = vmatpush1.msra.mxu0 %v1268
      %1270 = vmatprep.subr.mxu0 0.0
      %v1271 = vand.u32 %v34, 4294901760
      %1272 = vmatpush1.msra.mxu0 %v1271
      %1273 = vmatprep.subr.mxu0 0.0
      %v1274 = vand.u32 %v35, 4294901760
      %1275 = vmatpush1.msra.mxu0 %v1274
      %1276 = vmatprep.subr.mxu0 0.0
      %v1277 = vand.u32 %v36, 4294901760
      %1278 = vmatpush1.msra.mxu0 %v1277
      %1279 = vmatprep.subr.mxu0 0.0
      %v1280 = vand.u32 %v37, 4294901760
      %1281 = vmatpush1.msra.mxu0 %v1280
      %1282 = vmatprep.subr.mxu0 0.0
      %v1283 = vand.u32 %v38, 4294901760
      %1284 = vmatpush1.msra.mxu0 %v1283
      %1285 = vmatprep.subr.mxu0 0.0
      %v1286 = vand.u32 %v39, 4294901760
      %1287 = vmatpush1.msra.mxu0 %v1286
      %1288 = vmatprep.subr.mxu0 0.0
      %v1289 = vand.u32 %v40, 4294901760
      %1290 = vmatpush1.msra.mxu0 %v1289
      %1291 = vmatprep.subr.mxu0 0.0
      %v1292 = vand.u32 %v41, 4294901760
      %1293 = vmatpush1.msra.mxu0 %v1292
      %1294 = vmatprep.subr.mxu0 0.0
      %v1295 = vand.u32 %v42, 4294901760
      %1296 = vmatpush1.msra.mxu0 %v1295
      %1297 = vmatprep.subr.mxu0 0.0
      %1298 = vmatpush1.msra.mxu0 0.0
      %1299 = vmatprep.subr.mxu0 0.0
      %1300 = vmatpush1.msra.mxu0 0.0
      %1301 = vmatprep.subr.mxu0 0.0
      %1302 = vmatpush1.msra.mxu0 0.0
      %1303 = vmatprep.subr.mxu0 0.0
      %1304 = vmatpush1.msra.mxu0 0.0
      %1305 = vmatprep.subr.mxu0 0.0
      %1306 = vmatpush1.msra.mxu0 0.0
      %1307 = vmatprep.subr.mxu0 0.0
      %1308 = vmatpush1.msra.mxu0 0.0
      %1309 = vmatprep.subr.mxu0 0.0
      %1310 = vmatpush1.msra.mxu0 0.0
      %1311 = vmatprep.subr.mxu0 0.0
      %1312 = vmatpush1.msra.mxu0 0.0
      %1313 = vmatprep.subr.mxu0 0.0
      %1314 = vmatpush1.msra.mxu0 0.0
      %1315 = vmatprep.subr.mxu0 0.0
      %1316 = vmatpush1.msra.mxu0 0.0
      %1317 = vmatprep.subr.mxu0 0.0
      %1318 = vmatpush1.msra.mxu0 0.0
      %1319 = vmatprep.subr.mxu0 0.0
      %1320 = vmatpush1.msra.mxu0 0.0
      %1321 = vmatprep.subr.mxu0 0.0
      %1322 = vmatpush1.msra.mxu0 0.0
      %1323 = vmatprep.subr.mxu0 0.0
      %1324 = vmatpush1.msra.mxu0 0.0
      %1325 = vmatprep.subr.mxu0 0.0
      %1326 = vmatpush1.msra.mxu0 0.0
      %1327 = vmatprep.subr.mxu0 0.0
      %1328 = vmatpush1.msra.mxu0 0.0
      %1329 = vmatprep.mubr.f32.mxu0 0.0
      %v1330 = vand.u32 %v692, 4294901760
      %1331 = vmatmul.mubr.f32.gmra.mrb[0].mxu0 %v1330
      %v1332 = vpop.f32.mrb[0].mxu0
      %v1333 = vadd.f32 %v1246, %v1332
      %v1334 = vpop.f32.mrb[0].mxu0
      %1335 = vdwg.mxu0
      %1336 = vmatprep.subr.mxu0 0.0
      %v1337 = vand.u32 %v27, 4294901760
      %1338 = vmatpush1.msra.mxu0 %v1337
      %1339 = vmatprep.subr.mxu0 0.0
      %v1340 = vand.u32 %v28, 4294901760
      %1341 = vmatpush1.msra.mxu0 %v1340
      %1342 = vmatprep.subr.mxu0 0.0
      %v1343 = vand.u32 %v29, 4294901760
      %1344 = vmatpush1.msra.mxu0 %v1343
      %1345 = vmatprep.subr.mxu0 0.0
      %v1346 = vand.u32 %v30, 4294901760
      %1347 = vmatpush1.msra.mxu0 %v1346
      %1348 = vmatprep.subr.mxu0 0.0
      %v1349 = vand.u32 %v31, 4294901760
      %1350 = vmatpush1.msra.mxu0 %v1349
      %1351 = vmatprep.subr.mxu0 0.0
      %v1352 = vand.u32 %v32, 4294901760
      %1353 = vmatpush1.msra.mxu0 %v1352
      %1354 = vmatprep.subr.mxu0 0.0
      %v1355 = vand.u32 %v33, 4294901760
      %1356 = vmatpush1.msra.mxu0 %v1355
      %1357 = vmatprep.subr.mxu0 0.0
      %v1358 = vand.u32 %v34, 4294901760
      %1359 = vmatpush1.msra.mxu0 %v1358
      %1360 = vmatprep.subr.mxu0 0.0
      %v1361 = vand.u32 %v35, 4294901760
      %1362 = vmatpush1.msra.mxu0 %v1361
      %1363 = vmatprep.subr.mxu0 0.0
      %v1364 = vand.u32 %v36, 4294901760
      %1365 = vmatpush1.msra.mxu0 %v1364
      %1366 = vmatprep.subr.mxu0 0.0
      %v1367 = vand.u32 %v37, 4294901760
      %1368 = vmatpush1.msra.mxu0 %v1367
      %1369 = vmatprep.subr.mxu0 0.0
      %v1370 = vand.u32 %v38, 4294901760
      %1371 = vmatpush1.msra.mxu0 %v1370
      %1372 = vmatprep.subr.mxu0 0.0
      %v1373 = vand.u32 %v39, 4294901760
      %1374 = vmatpush1.msra.mxu0 %v1373
      %1375 = vmatprep.subr.mxu0 0.0
      %v1376 = vand.u32 %v40, 4294901760
      %1377 = vmatpush1.msra.mxu0 %v1376
      %1378 = vmatprep.subr.mxu0 0.0
      %v1379 = vand.u32 %v41, 4294901760
      %1380 = vmatpush1.msra.mxu0 %v1379
      %1381 = vmatprep.subr.mxu0 0.0
      %v1382 = vand.u32 %v42, 4294901760
      %1383 = vmatpush1.msra.mxu0 %v1382
      %1384 = vmatprep.subr.mxu0 0.0
      %1385 = vmatpush1.msra.mxu0 0.0
      %1386 = vmatprep.subr.mxu0 0.0
      %1387 = vmatpush1.msra.mxu0 0.0
      %1388 = vmatprep.subr.mxu0 0.0
      %1389 = vmatpush1.msra.mxu0 0.0
      %1390 = vmatprep.subr.mxu0 0.0
      %1391 = vmatpush1.msra.mxu0 0.0
      %1392 = vmatprep.subr.mxu0 0.0
      %1393 = vmatpush1.msra.mxu0 0.0
      %1394 = vmatprep.subr.mxu0 0.0
      %1395 = vmatpush1.msra.mxu0 0.0
      %1396 = vmatprep.subr.mxu0 0.0
      %1397 = vmatpush1.msra.mxu0 0.0
      %1398 = vmatprep.subr.mxu0 0.0
      %1399 = vmatpush1.msra.mxu0 0.0
      %1400 = vmatprep.subr.mxu0 0.0
      %1401 = vmatpush1.msra.mxu0 0.0
      %1402 = vmatprep.subr.mxu0 0.0
      %1403 = vmatpush1.msra.mxu0 0.0
      %1404 = vmatprep.subr.mxu0 0.0
      %1405 = vmatpush1.msra.mxu0 0.0
      %1406 = vmatprep.subr.mxu0 0.0
      %1407 = vmatpush1.msra.mxu0 0.0
      %1408 = vmatprep.subr.mxu0 0.0
      %1409 = vmatpush1.msra.mxu0 0.0
      %1410 = vmatprep.subr.mxu0 0.0
      %1411 = vmatpush1.msra.mxu0 0.0
      %1412 = vmatprep.subr.mxu0 0.0
      %1413 = vmatpush1.msra.mxu0 0.0
      %1414 = vmatprep.subr.mxu0 0.0
      %1415 = vmatpush1.msra.mxu0 0.0
      %1416 = vmatprep.mubr.f32.mxu0 0.0
      %v1417 = vand.u32 %v1333, 4294901760
      %v1418 = vsub.f32 %v1333, %v1417
      %v1419 = vand.u32 %v1418, 4294901760
      %v1420 = vsub.f32 %v1418, %v1419
      %v1421 = vand.u32 %v1420, 4294901760
      %1422 = vmatmul.mubr.f32.gmra.mrb[0].mxu0 %v1421
      %v1423 = vpop.f32.mrb[0].mxu0
      %v1424 = vadd.f32 %v43, %v1423
      %v1425 = vpop.f32.mrb[0].mxu0
      %1426 = vdwg.mxu0
      %1427 = vmatprep.subr.mxu0 0.0
      %v1428 = vand.u32 %v27, 4294901760
      %v1429 = vsub.f32 %v27, %v1428
      %v1430 = vand.u32 %v1429, 4294901760
      %v1431 = vsub.f32 %v1429, %v1430
      %v1432 = vand.u32 %v1431, 4294901760
      %1433 = vmatpush1.msra.mxu0 %v1432
      %1434 = vmatprep.subr.mxu0 0.0
      %v1435 = vand.u32 %v28, 4294901760
      %v1436 = vsub.f32 %v28, %v1435
      %v1437 = vand.u32 %v1436, 4294901760
      %v1438 = vsub.f32 %v1436, %v1437
      %v1439 = vand.u32 %v1438, 4294901760
      %1440 = vmatpush1.msra.mxu0 %v1439
      %1441 = vmatprep.subr.mxu0 0.0
      %v1442 = vand.u32 %v29, 4294901760
      %v1443 = vsub.f32 %v29, %v1442
      %v1444 = vand.u32 %v1443, 4294901760
      %v1445 = vsub.f32 %v1443, %v1444
      %v1446 = vand.u32 %v1445, 4294901760
      %1447 = vmatpush1.msra.mxu0 %v1446
      %1448 = vmatprep.subr.mxu0 0.0
      %v1449 = vand.u32 %v30, 4294901760
      %v1450 = vsub.f32 %v30, %v1449
      %v1451 = vand.u32 %v1450, 4294901760
      %v1452 = vsub.f32 %v1450, %v1451
      %v1453 = vand.u32 %v1452, 4294901760
      %1454 = vmatpush1.msra.mxu0 %v1453
      %1455 = vmatprep.subr.mxu0 0.0
      %v1456 = vand.u32 %v31, 4294901760
      %v1457 = vsub.f32 %v31, %v1456
      %v1458 = vand.u32 %v1457, 4294901760
      %v1459 = vsub.f32 %v1457, %v1458
      %v1460 = vand.u32 %v1459, 4294901760
      %1461 = vmatpush1.msra.mxu0 %v1460
      %1462 = vmatprep.subr.mxu0 0.0
      %v1463 = vand.u32 %v32, 4294901760
      %v1464 = vsub.f32 %v32, %v1463
      %v1465 = vand.u32 %v1464, 4294901760
      %v1466 = vsub.f32 %v1464, %v1465
      %v1467 = vand.u32 %v1466, 4294901760
      %1468 = vmatpush1.msra.mxu0 %v1467
      %1469 = vmatprep.subr.mxu0 0.0
      %v1470 = vand.u32 %v33, 4294901760
      %v1471 = vsub.f32 %v33, %v1470
      %v1472 = vand.u32 %v1471, 4294901760
      %v1473 = vsub.f32 %v1471, %v1472
      %v1474 = vand.u32 %v1473, 4294901760
      %1475 = vmatpush1.msra.mxu0 %v1474
      %1476 = vmatprep.subr.mxu0 0.0
      %v1477 = vand.u32 %v34, 4294901760
      %v1478 = vsub.f32 %v34, %v1477
      %v1479 = vand.u32 %v1478, 4294901760
      %v1480 = vsub.f32 %v1478, %v1479
      %v1481 = vand.u32 %v1480, 4294901760
      %1482 = vmatpush1.msra.mxu0 %v1481
      %1483 = vmatprep.subr.mxu0 0.0
      %v1484 = vand.u32 %v35, 4294901760
      %v1485 = vsub.f32 %v35, %v1484
      %v1486 = vand.u32 %v1485, 4294901760
      %v1487 = vsub.f32 %v1485, %v1486
      %v1488 = vand.u32 %v1487, 4294901760
      %1489 = vmatpush1.msra.mxu0 %v1488
      %1490 = vmatprep.subr.mxu0 0.0
      %v1491 = vand.u32 %v36, 4294901760
      %v1492 = vsub.f32 %v36, %v1491
      %v1493 = vand.u32 %v1492, 4294901760
      %v1494 = vsub.f32 %v1492, %v1493
      %v1495 = vand.u32 %v1494, 4294901760
      %1496 = vmatpush1.msra.mxu0 %v1495
      %1497 = vmatprep.subr.mxu0 0.0
      %v1498 = vand.u32 %v37, 4294901760
      %v1499 = vsub.f32 %v37, %v1498
      %v1500 = vand.u32 %v1499, 4294901760
      %v1501 = vsub.f32 %v1499, %v1500
      %v1502 = vand.u32 %v1501, 4294901760
      %1503 = vmatpush1.msra.mxu0 %v1502
      %1504 = vmatprep.subr.mxu0 0.0
      %v1505 = vand.u32 %v38, 4294901760
      %v1506 = vsub.f32 %v38, %v1505
      %v1507 = vand.u32 %v1506, 4294901760
      %v1508 = vsub.f32 %v1506, %v1507
      %v1509 = vand.u32 %v1508, 4294901760
      %1510 = vmatpush1.msra.mxu0 %v1509
      %1511 = vmatprep.subr.mxu0 0.0
      %v1512 = vand.u32 %v39, 4294901760
      %v1513 = vsub.f32 %v39, %v1512
      %v1514 = vand.u32 %v1513, 4294901760
      %v1515 = vsub.f32 %v1513, %v1514
      %v1516 = vand.u32 %v1515, 4294901760
      %1517 = vmatpush1.msra.mxu0 %v1516
      %1518 = vmatprep.subr.mxu0 0.0
      %v1519 = vand.u32 %v40, 4294901760
      %v1520 = vsub.f32 %v40, %v1519
      %v1521 = vand.u32 %v1520, 4294901760
      %v1522 = vsub.f32 %v1520, %v1521
      %v1523 = vand.u32 %v1522, 4294901760
      %1524 = vmatpush1.msra.mxu0 %v1523
      %1525 = vmatprep.subr.mxu0 0.0
      %v1526 = vand.u32 %v41, 4294901760
      %v1527 = vsub.f32 %v41, %v1526
      %v1528 = vand.u32 %v1527, 4294901760
      %v1529 = vsub.f32 %v1527, %v1528
      %v1530 = vand.u32 %v1529, 4294901760
      %1531 = vmatpush1.msra.mxu0 %v1530
      %1532 = vmatprep.subr.mxu0 0.0
      %v1533 = vand.u32 %v42, 4294901760
      %v1534 = vsub.f32 %v42, %v1533
      %v1535 = vand.u32 %v1534, 4294901760
      %v1536 = vsub.f32 %v1534, %v1535
      %v1537 = vand.u32 %v1536, 4294901760
      %1538 = vmatpush1.msra.mxu0 %v1537
      %1539 = vmatprep.subr.mxu0 0.0
      %1540 = vmatpush1.msra.mxu0 0.0
      %1541 = vmatprep.subr.mxu0 0.0
      %1542 = vmatpush1.msra.mxu0 0.0
      %1543 = vmatprep.subr.mxu0 0.0
      %1544 = vmatpush1.msra.mxu0 0.0
      %1545 = vmatprep.subr.mxu0 0.0
      %1546 = vmatpush1.msra.mxu0 0.0
      %1547 = vmatprep.subr.mxu0 0.0
      %1548 = vmatpush1.msra.mxu0 0.0
      %1549 = vmatprep.subr.mxu0 0.0
      %1550 = vmatpush1.msra.mxu0 0.0
      %1551 = vmatprep.subr.mxu0 0.0
      %1552 = vmatpush1.msra.mxu0 0.0
      %1553 = vmatprep.subr.mxu0 0.0
      %1554 = vmatpush1.msra.mxu0 0.0
      %1555 = vmatprep.subr.mxu0 0.0
      %1556 = vmatpush1.msra.mxu0 0.0
      %1557 = vmatprep.subr.mxu0 0.0
      %1558 = vmatpush1.msra.mxu0 0.0
      %1559 = vmatprep.subr.mxu0 0.0
      %1560 = vmatpush1.msra.mxu0 0.0
      %1561 = vmatprep.subr.mxu0 0.0
      %1562 = vmatpush1.msra.mxu0 0.0
      %1563 = vmatprep.subr.mxu0 0.0
      %1564 = vmatpush1.msra.mxu0 0.0
      %1565 = vmatprep.subr.mxu0 0.0
      %1566 = vmatpush1.msra.mxu0 0.0
      %1567 = vmatprep.subr.mxu0 0.0
      %1568 = vmatpush1.msra.mxu0 0.0
      %1569 = vmatprep.subr.mxu0 0.0
      %1570 = vmatpush1.msra.mxu0 0.0
      %1571 = vmatprep.mubr.f32.mxu0 0.0
      %v1572 = vand.u32 %v1333, 4294901760
      %1573 = vmatmul.mubr.f32.gmra.mrb[0].mxu0 %v1572
      %v1574 = vpop.f32.mrb[0].mxu0
      %v1575 = vadd.f32 %v1424, %v1574
      %v1576 = vpop.f32.mrb[0].mxu0
      %1577 = vdwg.mxu0
      %1578 = vmatprep.subr.mxu0 0.0
      %v1579 = vand.u32 %v27, 4294901760
      %v1580 = vsub.f32 %v27, %v1579
      %1581 = vmatpush1.msra.mxu0 %v1580
      %1582 = vmatprep.subr.mxu0 0.0
      %v1583 = vand.u32 %v28, 4294901760
      %v1584 = vsub.f32 %v28, %v1583
      %1585 = vmatpush1.msra.mxu0 %v1584
      %1586 = vmatprep.subr.mxu0 0.0
      %v1587 = vand.u32 %v29, 4294901760
      %v1588 = vsub.f32 %v29, %v1587
      %1589 = vmatpush1.msra.mxu0 %v1588
      %1590 = vmatprep.subr.mxu0 0.0
      %v1591 = vand.u32 %v30, 4294901760
      %v1592 = vsub.f32 %v30, %v1591
      %1593 = vmatpush1.msra.mxu0 %v1592
      %1594 = vmatprep.subr.mxu0 0.0
      %v1595 = vand.u32 %v31, 4294901760
      %v1596 = vsub.f32 %v31, %v1595
      %1597 = vmatpush1.msra.mxu0 %v1596
      %1598 = vmatprep.subr.mxu0 0.0
      %v1599 = vand.u32 %v32, 4294901760
      %v1600 = vsub.f32 %v32, %v1599
      %1601 = vmatpush1.msra.mxu0 %v1600
      %1602 = vmatprep.subr.mxu0 0.0
      %v1603 = vand.u32 %v33, 4294901760
      %v1604 = vsub.f32 %v33, %v1603
      %1605 = vmatpush1.msra.mxu0 %v1604
      %1606 = vmatprep.subr.mxu0 0.0
      %v1607 = vand.u32 %v34, 4294901760
      %v1608 = vsub.f32 %v34, %v1607
      %1609 = vmatpush1.msra.mxu0 %v1608
      %1610 = vmatprep.subr.mxu0 0.0
      %v1611 = vand.u32 %v35, 4294901760
      %v1612 = vsub.f32 %v35, %v1611
      %1613 = vmatpush1.msra.mxu0 %v1612
      %1614 = vmatprep.subr.mxu0 0.0
      %v1615 = vand.u32 %v36, 4294901760
      %v1616 = vsub.f32 %v36, %v1615
      %1617 = vmatpush1.msra.mxu0 %v1616
      %1618 = vmatprep.subr.mxu0 0.0
      %v1619 = vand.u32 %v37, 4294901760
      %v1620 = vsub.f32 %v37, %v1619
      %1621 = vmatpush1.msra.mxu0 %v1620
      %1622 = vmatprep.subr.mxu0 0.0
      %v1623 = vand.u32 %v38, 4294901760
      %v1624 = vsub.f32 %v38, %v1623
      %1625 = vmatpush1.msra.mxu0 %v1624
      %1626 = vmatprep.subr.mxu0 0.0
      %v1627 = vand.u32 %v39, 4294901760
      %v1628 = vsub.f32 %v39, %v1627
      %1629 = vmatpush1.msra.mxu0 %v1628
      %1630 = vmatprep.subr.mxu0 0.0
      %v1631 = vand.u32 %v40, 4294901760
      %v1632 = vsub.f32 %v40, %v1631
      %1633 = vmatpush1.msra.mxu0 %v1632
      %1634 = vmatprep.subr.mxu0 0.0
      %v1635 = vand.u32 %v41, 4294901760
      %v1636 = vsub.f32 %v41, %v1635
      %1637 = vmatpush1.msra.mxu0 %v1636
      %1638 = vmatprep.subr.mxu0 0.0
      %v1639 = vand.u32 %v42, 4294901760
      %v1640 = vsub.f32 %v42, %v1639
      %1641 = vmatpush1.msra.mxu0 %v1640
      %1642 = vmatprep.subr.mxu0 0.0
      %1643 = vmatpush1.msra.mxu0 0.0
      %1644 = vmatprep.subr.mxu0 0.0
      %1645 = vmatpush1.msra.mxu0 0.0
      %1646 = vmatprep.subr.mxu0 0.0
      %1647 = vmatpush1.msra.mxu0 0.0
      %1648 = vmatprep.subr.mxu0 0.0
      %1649 = vmatpush1.msra.mxu0 0.0
      %1650 = vmatprep.subr.mxu0 0.0
      %1651 = vmatpush1.msra.mxu0 0.0
      %1652 = vmatprep.subr.mxu0 0.0
      %1653 = vmatpush1.msra.mxu0 0.0
      %1654 = vmatprep.subr.mxu0 0.0
      %1655 = vmatpush1.msra.mxu0 0.0
      %1656 = vmatprep.subr.mxu0 0.0
      %1657 = vmatpush1.msra.mxu0 0.0
      %1658 = vmatprep.subr.mxu0 0.0
      %1659 = vmatpush1.msra.mxu0 0.0
      %1660 = vmatprep.subr.mxu0 0.0
      %1661 = vmatpush1.msra.mxu0 0.0
      %1662 = vmatprep.subr.mxu0 0.0
      %1663 = vmatpush1.msra.mxu0 0.0
      %1664 = vmatprep.subr.mxu0 0.0
      %1665 = vmatpush1.msra.mxu0 0.0
      %1666 = vmatprep.subr.mxu0 0.0
      %1667 = vmatpush1.msra.mxu0 0.0
      %1668 = vmatprep.subr.mxu0 0.0
      %1669 = vmatpush1.msra.mxu0 0.0
      %1670 = vmatprep.subr.mxu0 0.0
      %1671 = vmatpush1.msra.mxu0 0.0
      %1672 = vmatprep.subr.mxu0 0.0
      %1673 = vmatpush1.msra.mxu0 0.0
      %1674 = vmatprep.mubr.f32.mxu0 0.0
      %v1675 = vand.u32 %v1333, 4294901760
      %v1676 = vsub.f32 %v1333, %v1675
      %1677 = vmatmul.mubr.f32.gmra.mrb[0].mxu0 %v1676
      %v1678 = vpop.f32.mrb[0].mxu0
      %v1679 = vadd.f32 %v1575, %v1678
      %v1680 = vpop.f32.mrb[0].mxu0
      %1681 = vdwg.mxu0
      %1682 = vmatprep.subr.mxu0 0.0
      %v1683 = vand.u32 %v27, 4294901760
      %1684 = vmatpush1.msra.mxu0 %v1683
      %1685 = vmatprep.subr.mxu0 0.0
      %v1686 = vand.u32 %v28, 4294901760
      %1687 = vmatpush1.msra.mxu0 %v1686
      %1688 = vmatprep.subr.mxu0 0.0
      %v1689 = vand.u32 %v29, 4294901760
      %1690 = vmatpush1.msra.mxu0 %v1689
      %1691 = vmatprep.subr.mxu0 0.0
      %v1692 = vand.u32 %v30, 4294901760
      %1693 = vmatpush1.msra.mxu0 %v1692
      %1694 = vmatprep.subr.mxu0 0.0
      %v1695 = vand.u32 %v31, 4294901760
      %1696 = vmatpush1.msra.mxu0 %v1695
      %1697 = vmatprep.subr.mxu0 0.0
      %v1698 = vand.u32 %v32, 4294901760
      %1699 = vmatpush1.msra.mxu0 %v1698
      %1700 = vmatprep.subr.mxu0 0.0
      %v1701 = vand.u32 %v33, 4294901760
      %1702 = vmatpush1.msra.mxu0 %v1701
      %1703 = vmatprep.subr.mxu0 0.0
      %v1704 = vand.u32 %v34, 4294901760
      %1705 = vmatpush1.msra.mxu0 %v1704
      %1706 = vmatprep.subr.mxu0 0.0
      %v1707 = vand.u32 %v35, 4294901760
      %1708 = vmatpush1.msra.mxu0 %v1707
      %1709 = vmatprep.subr.mxu0 0.0
      %v1710 = vand.u32 %v36, 4294901760
      %1711 = vmatpush1.msra.mxu0 %v1710
      %1712 = vmatprep.subr.mxu0 0.0
      %v1713 = vand.u32 %v37, 4294901760
      %1714 = vmatpush1.msra.mxu0 %v1713
      %1715 = vmatprep.subr.mxu0 0.0
      %v1716 = vand.u32 %v38, 4294901760
      %1717 = vmatpush1.msra.mxu0 %v1716
      %1718 = vmatprep.subr.mxu0 0.0
      %v1719 = vand.u32 %v39, 4294901760
      %1720 = vmatpush1.msra.mxu0 %v1719
      %1721 = vmatprep.subr.mxu0 0.0
      %v1722 = vand.u32 %v40, 4294901760
      %1723 = vmatpush1.msra.mxu0 %v1722
      %1724 = vmatprep.subr.mxu0 0.0
      %v1725 = vand.u32 %v41, 4294901760
      %1726 = vmatpush1.msra.mxu0 %v1725
      %1727 = vmatprep.subr.mxu0 0.0
      %v1728 = vand.u32 %v42, 4294901760
      %1729 = vmatpush1.msra.mxu0 %v1728
      %1730 = vmatprep.subr.mxu0 0.0
      %1731 = vmatpush1.msra.mxu0 0.0
      %1732 = vmatprep.subr.mxu0 0.0
      %1733 = vmatpush1.msra.mxu0 0.0
      %1734 = vmatprep.subr.mxu0 0.0
      %1735 = vmatpush1.msra.mxu0 0.0
      %1736 = vmatprep.subr.mxu0 0.0
      %1737 = vmatpush1.msra.mxu0 0.0
      %1738 = vmatprep.subr.mxu0 0.0
      %1739 = vmatpush1.msra.mxu0 0.0
      %1740 = vmatprep.subr.mxu0 0.0
      %1741 = vmatpush1.msra.mxu0 0.0
      %1742 = vmatprep.subr.mxu0 0.0
      %1743 = vmatpush1.msra.mxu0 0.0
      %1744 = vmatprep.subr.mxu0 0.0
      %1745 = vmatpush1.msra.mxu0 0.0
      %1746 = vmatprep.subr.mxu0 0.0
      %1747 = vmatpush1.msra.mxu0 0.0
      %1748 = vmatprep.subr.mxu0 0.0
      %1749 = vmatpush1.msra.mxu0 0.0
      %1750 = vmatprep.subr.mxu0 0.0
      %1751 = vmatpush1.msra.mxu0 0.0
      %1752 = vmatprep.subr.mxu0 0.0
      %1753 = vmatpush1.msra.mxu0 0.0
      %1754 = vmatprep.subr.mxu0 0.0
      %1755 = vmatpush1.msra.mxu0 0.0
      %1756 = vmatprep.subr.mxu0 0.0
      %1757 = vmatpush1.msra.mxu0 0.0
      %1758 = vmatprep.subr.mxu0 0.0
      %1759 = vmatpush1.msra.mxu0 0.0
      %1760 = vmatprep.subr.mxu0 0.0
      %1761 = vmatpush1.msra.mxu0 0.0
      %1762 = vmatprep.mubr.f32.mxu0 0.0
      %v1763 = vand.u32 %v1333, 4294901760
      %v1764 = vsub.f32 %v1333, %v1763
      %v1765 = vand.u32 %v1764, 4294901760
      %1766 = vmatmul.mubr.f32.gmra.mrb[0].mxu0 %v1765
      %v1767 = vpop.f32.mrb[0].mxu0
      %v1768 = vadd.f32 %v1679, %v1767
      %v1769 = vpop.f32.mrb[0].mxu0
      %1770 = vdwg.mxu0
      %1771 = vmatprep.subr.mxu0 0.0
      %v1772 = vand.u32 %v27, 4294901760
      %v1773 = vsub.f32 %v27, %v1772
      %v1774 = vand.u32 %v1773, 4294901760
      %1775 = vmatpush1.msra.mxu0 %v1774
      %1776 = vmatprep.subr.mxu0 0.0
      %v1777 = vand.u32 %v28, 4294901760
      %v1778 = vsub.f32 %v28, %v1777
      %v1779 = vand.u32 %v1778, 4294901760
      %1780 = vmatpush1.msra.mxu0 %v1779
      %1781 = vmatprep.subr.mxu0 0.0
      %v1782 = vand.u32 %v29, 4294901760
      %v1783 = vsub.f32 %v29, %v1782
      %v1784 = vand.u32 %v1783, 4294901760
      %1785 = vmatpush1.msra.mxu0 %v1784
      %1786 = vmatprep.subr.mxu0 0.0
      %v1787 = vand.u32 %v30, 4294901760
      %v1788 = vsub.f32 %v30, %v1787
      %v1789 = vand.u32 %v1788, 4294901760
      %1790 = vmatpush1.msra.mxu0 %v1789
      %1791 = vmatprep.subr.mxu0 0.0
      %v1792 = vand.u32 %v31, 4294901760
      %v1793 = vsub.f32 %v31, %v1792
      %v1794 = vand.u32 %v1793, 4294901760
      %1795 = vmatpush1.msra.mxu0 %v1794
      %1796 = vmatprep.subr.mxu0 0.0
      %v1797 = vand.u32 %v32, 4294901760
      %v1798 = vsub.f32 %v32, %v1797
      %v1799 = vand.u32 %v1798, 4294901760
      %1800 = vmatpush1.msra.mxu0 %v1799
      %1801 = vmatprep.subr.mxu0 0.0
      %v1802 = vand.u32 %v33, 4294901760
      %v1803 = vsub.f32 %v33, %v1802
      %v1804 = vand.u32 %v1803, 4294901760
      %1805 = vmatpush1.msra.mxu0 %v1804
      %1806 = vmatprep.subr.mxu0 0.0
      %v1807 = vand.u32 %v34, 4294901760
      %v1808 = vsub.f32 %v34, %v1807
      %v1809 = vand.u32 %v1808, 4294901760
      %1810 = vmatpush1.msra.mxu0 %v1809
      %1811 = vmatprep.subr.mxu0 0.0
      %v1812 = vand.u32 %v35, 4294901760
      %v1813 = vsub.f32 %v35, %v1812
      %v1814 = vand.u32 %v1813, 4294901760
      %1815 = vmatpush1.msra.mxu0 %v1814
      %1816 = vmatprep.subr.mxu0 0.0
      %v1817 = vand.u32 %v36, 4294901760
      %v1818 = vsub.f32 %v36, %v1817
      %v1819 = vand.u32 %v1818, 4294901760
      %1820 = vmatpush1.msra.mxu0 %v1819
      %1821 = vmatprep.subr.mxu0 0.0
      %v1822 = vand.u32 %v37, 4294901760
      %v1823 = vsub.f32 %v37, %v1822
      %v1824 = vand.u32 %v1823, 4294901760
      %1825 = vmatpush1.msra.mxu0 %v1824
      %1826 = vmatprep.subr.mxu0 0.0
      %v1827 = vand.u32 %v38, 4294901760
      %v1828 = vsub.f32 %v38, %v1827
      %v1829 = vand.u32 %v1828, 4294901760
      %1830 = vmatpush1.msra.mxu0 %v1829
      %1831 = vmatprep.subr.mxu0 0.0
      %v1832 = vand.u32 %v39, 4294901760
      %v1833 = vsub.f32 %v39, %v1832
      %v1834 = vand.u32 %v1833, 4294901760
      %1835 = vmatpush1.msra.mxu0 %v1834
      %1836 = vmatprep.subr.mxu0 0.0
      %v1837 = vand.u32 %v40, 4294901760
      %v1838 = vsub.f32 %v40, %v1837
      %v1839 = vand.u32 %v1838, 4294901760
      %1840 = vmatpush1.msra.mxu0 %v1839
      %1841 = vmatprep.subr.mxu0 0.0
      %v1842 = vand.u32 %v41, 4294901760
      %v1843 = vsub.f32 %v41, %v1842
      %v1844 = vand.u32 %v1843, 4294901760
      %1845 = vmatpush1.msra.mxu0 %v1844
      %1846 = vmatprep.subr.mxu0 0.0
      %v1847 = vand.u32 %v42, 4294901760
      %v1848 = vsub.f32 %v42, %v1847
      %v1849 = vand.u32 %v1848, 4294901760
      %1850 = vmatpush1.msra.mxu0 %v1849
      %1851 = vmatprep.subr.mxu0 0.0
      %1852 = vmatpush1.msra.mxu0 0.0
      %1853 = vmatprep.subr.mxu0 0.0
      %1854 = vmatpush1.msra.mxu0 0.0
      %1855 = vmatprep.subr.mxu0 0.0
      %1856 = vmatpush1.msra.mxu0 0.0
      %1857 = vmatprep.subr.mxu0 0.0
      %1858 = vmatpush1.msra.mxu0 0.0
      %1859 = vmatprep.subr.mxu0 0.0
      %1860 = vmatpush1.msra.mxu0 0.0
      %1861 = vmatprep.subr.mxu0 0.0
      %1862 = vmatpush1.msra.mxu0 0.0
      %1863 = vmatprep.subr.mxu0 0.0
      %1864 = vmatpush1.msra.mxu0 0.0
      %1865 = vmatprep.subr.mxu0 0.0
      %1866 = vmatpush1.msra.mxu0 0.0
      %1867 = vmatprep.subr.mxu0 0.0
      %1868 = vmatpush1.msra.mxu0 0.0
      %1869 = vmatprep.subr.mxu0 0.0
      %1870 = vmatpush1.msra.mxu0 0.0
      %1871 = vmatprep.subr.mxu0 0.0
      %1872 = vmatpush1.msra.mxu0 0.0
      %1873 = vmatprep.subr.mxu0 0.0
      %1874 = vmatpush1.msra.mxu0 0.0
      %1875 = vmatprep.subr.mxu0 0.0
      %1876 = vmatpush1.msra.mxu0 0.0
      %1877 = vmatprep.subr.mxu0 0.0
      %1878 = vmatpush1.msra.mxu0 0.0
      %1879 = vmatprep.subr.mxu0 0.0
      %1880 = vmatpush1.msra.mxu0 0.0
      %1881 = vmatprep.subr.mxu0 0.0
      %1882 = vmatpush1.msra.mxu0 0.0
      %1883 = vmatprep.mubr.f32.mxu0 0.0
      %v1884 = vand.u32 %v1333, 4294901760
      %1885 = vmatmul.mubr.f32.gmra.mrb[0].mxu0 %v1884
      %v1886 = vpop.f32.mrb[0].mxu0
      %v1887 = vadd.f32 %v1768, %v1886
      %v1888 = vpop.f32.mrb[0].mxu0
      %1889 = vdwg.mxu0
      %1890 = vmatprep.subr.mxu0 0.0
      %v1891 = vand.u32 %v27, 4294901760
      %1892 = vmatpush1.msra.mxu0 %v1891
      %1893 = vmatprep.subr.mxu0 0.0
      %v1894 = vand.u32 %v28, 4294901760
      %1895 = vmatpush1.msra.mxu0 %v1894
      %1896 = vmatprep.subr.mxu0 0.0
      %v1897 = vand.u32 %v29, 4294901760
      %1898 = vmatpush1.msra.mxu0 %v1897
      %1899 = vmatprep.subr.mxu0 0.0
      %v1900 = vand.u32 %v30, 4294901760
      %1901 = vmatpush1.msra.mxu0 %v1900
      %1902 = vmatprep.subr.mxu0 0.0
      %v1903 = vand.u32 %v31, 4294901760
      %1904 = vmatpush1.msra.mxu0 %v1903
      %1905 = vmatprep.subr.mxu0 0.0
      %v1906 = vand.u32 %v32, 4294901760
      %1907 = vmatpush1.msra.mxu0 %v1906
      %1908 = vmatprep.subr.mxu0 0.0
      %v1909 = vand.u32 %v33, 4294901760
      %1910 = vmatpush1.msra.mxu0 %v1909
      %1911 = vmatprep.subr.mxu0 0.0
      %v1912 = vand.u32 %v34, 4294901760
      %1913 = vmatpush1.msra.mxu0 %v1912
      %1914 = vmatprep.subr.mxu0 0.0
      %v1915 = vand.u32 %v35, 4294901760
      %1916 = vmatpush1.msra.mxu0 %v1915
      %1917 = vmatprep.subr.mxu0 0.0
      %v1918 = vand.u32 %v36, 4294901760
      %1919 = vmatpush1.msra.mxu0 %v1918
      %1920 = vmatprep.subr.mxu0 0.0
      %v1921 = vand.u32 %v37, 4294901760
      %1922 = vmatpush1.msra.mxu0 %v1921
      %1923 = vmatprep.subr.mxu0 0.0
      %v1924 = vand.u32 %v38, 4294901760
      %1925 = vmatpush1.msra.mxu0 %v1924
      %1926 = vmatprep.subr.mxu0 0.0
      %v1927 = vand.u32 %v39, 4294901760
      %1928 = vmatpush1.msra.mxu0 %v1927
      %1929 = vmatprep.subr.mxu0 0.0
      %v1930 = vand.u32 %v40, 4294901760
      %1931 = vmatpush1.msra.mxu0 %v1930
      %1932 = vmatprep.subr.mxu0 0.0
      %v1933 = vand.u32 %v41, 4294901760
      %1934 = vmatpush1.msra.mxu0 %v1933
      %1935 = vmatprep.subr.mxu0 0.0
      %v1936 = vand.u32 %v42, 4294901760
      %1937 = vmatpush1.msra.mxu0 %v1936
      %1938 = vmatprep.subr.mxu0 0.0
      %1939 = vmatpush1.msra.mxu0 0.0
      %1940 = vmatprep.subr.mxu0 0.0
      %1941 = vmatpush1.msra.mxu0 0.0
      %1942 = vmatprep.subr.mxu0 0.0
      %1943 = vmatpush1.msra.mxu0 0.0
      %1944 = vmatprep.subr.mxu0 0.0
      %1945 = vmatpush1.msra.mxu0 0.0
      %1946 = vmatprep.subr.mxu0 0.0
      %1947 = vmatpush1.msra.mxu0 0.0
      %1948 = vmatprep.subr.mxu0 0.0
      %1949 = vmatpush1.msra.mxu0 0.0
      %1950 = vmatprep.subr.mxu0 0.0
      %1951 = vmatpush1.msra.mxu0 0.0
      %1952 = vmatprep.subr.mxu0 0.0
      %1953 = vmatpush1.msra.mxu0 0.0
      %1954 = vmatprep.subr.mxu0 0.0
      %1955 = vmatpush1.msra.mxu0 0.0
      %1956 = vmatprep.subr.mxu0 0.0
      %1957 = vmatpush1.msra.mxu0 0.0
      %1958 = vmatprep.subr.mxu0 0.0
      %1959 = vmatpush1.msra.mxu0 0.0
      %1960 = vmatprep.subr.mxu0 0.0
      %1961 = vmatpush1.msra.mxu0 0.0
      %1962 = vmatprep.subr.mxu0 0.0
      %1963 = vmatpush1.msra.mxu0 0.0
      %1964 = vmatprep.subr.mxu0 0.0
      %1965 = vmatpush1.msra.mxu0 0.0
      %1966 = vmatprep.subr.mxu0 0.0
      %1967 = vmatpush1.msra.mxu0 0.0
      %1968 = vmatprep.subr.mxu0 0.0
      %1969 = vmatpush1.msra.mxu0 0.0
      %1970 = vmatprep.mubr.f32.mxu0 0.0
      %v1971 = vand.u32 %v1333, 4294901760
      %1972 = vmatmul.mubr.f32.gmra.mrb[0].mxu0 %v1971
      %v1973 = vpop.f32.mrb[0].mxu0
      %v1974 = vadd.f32 %v1887, %v1973
      %v1975 = vpop.f32.mrb[0].mxu0
      %1976 = vdwg.mxu0
      %1977 = vmatprep.subr.mxu0 0.0
      %v1978 = vand.u32 %v27, 4294901760
      %1979 = vmatpush1.msra.mxu0 %v1978
      %1980 = vmatprep.subr.mxu0 0.0
      %v1981 = vand.u32 %v28, 4294901760
      %1982 = vmatpush1.msra.mxu0 %v1981
      %1983 = vmatprep.subr.mxu0 0.0
      %v1984 = vand.u32 %v29, 4294901760
      %1985 = vmatpush1.msra.mxu0 %v1984
      %1986 = vmatprep.subr.mxu0 0.0
      %v1987 = vand.u32 %v30, 4294901760
      %1988 = vmatpush1.msra.mxu0 %v1987
      %1989 = vmatprep.subr.mxu0 0.0
      %v1990 = vand.u32 %v31, 4294901760
      %1991 = vmatpush1.msra.mxu0 %v1990
      %1992 = vmatprep.subr.mxu0 0.0
      %v1993 = vand.u32 %v32, 4294901760
      %1994 = vmatpush1.msra.mxu0 %v1993
      %1995 = vmatprep.subr.mxu0 0.0
      %v1996 = vand.u32 %v33, 4294901760
      %1997 = vmatpush1.msra.mxu0 %v1996
      %1998 = vmatprep.subr.mxu0 0.0
      %v1999 = vand.u32 %v34, 4294901760
      %2000 = vmatpush1.msra.mxu0 %v1999
      %2001 = vmatprep.subr.mxu0 0.0
      %v2002 = vand.u32 %v35, 4294901760
      %2003 = vmatpush1.msra.mxu0 %v2002
      %2004 = vmatprep.subr.mxu0 0.0
      %v2005 = vand.u32 %v36, 4294901760
      %2006 = vmatpush1.msra.mxu0 %v2005
      %2007 = vmatprep.subr.mxu0 0.0
      %v2008 = vand.u32 %v37, 4294901760
      %2009 = vmatpush1.msra.mxu0 %v2008
      %2010 = vmatprep.subr.mxu0 0.0
      %v2011 = vand.u32 %v38, 4294901760
      %2012 = vmatpush1.msra.mxu0 %v2011
      %2013 = vmatprep.subr.mxu0 0.0
      %v2014 = vand.u32 %v39, 4294901760
      %2015 = vmatpush1.msra.mxu0 %v2014
      %2016 = vmatprep.subr.mxu0 0.0
      %v2017 = vand.u32 %v40, 4294901760
      %2018 = vmatpush1.msra.mxu0 %v2017
      %2019 = vmatprep.subr.mxu0 0.0
      %v2020 = vand.u32 %v41, 4294901760
      %2021 = vmatpush1.msra.mxu0 %v2020
      %2022 = vmatprep.subr.mxu0 0.0
      %v2023 = vand.u32 %v42, 4294901760
      %2024 = vmatpush1.msra.mxu0 %v2023
      %2025 = vmatprep.subr.mxu0 0.0
      %2026 = vmatpush1.msra.mxu0 0.0
      %2027 = vmatprep.subr.mxu0 0.0
      %2028 = vmatpush1.msra.mxu0 0.0
      %2029 = vmatprep.subr.mxu0 0.0
      %2030 = vmatpush1.msra.mxu0 0.0
      %2031 = vmatprep.subr.mxu0 0.0
      %2032 = vmatpush1.msra.mxu0 0.0
      %2033 = vmatprep.subr.mxu0 0.0
      %2034 = vmatpush1.msra.mxu0 0.0
      %2035 = vmatprep.subr.mxu0 0.0
      %2036 = vmatpush1.msra.mxu0 0.0
      %2037 = vmatprep.subr.mxu0 0.0
      %2038 = vmatpush1.msra.mxu0 0.0
      %2039 = vmatprep.subr.mxu0 0.0
      %2040 = vmatpush1.msra.mxu0 0.0
      %2041 = vmatprep.subr.mxu0 0.0
      %2042 = vmatpush1.msra.mxu0 0.0
      %2043 = vmatprep.subr.mxu0 0.0
      %2044 = vmatpush1.msra.mxu0 0.0
      %2045 = vmatprep.subr.mxu0 0.0
      %2046 = vmatpush1.msra.mxu0 0.0
      %2047 = vmatprep.subr.mxu0 0.0
      %2048 = vmatpush1.msra.mxu0 0.0
      %2049 = vmatprep.subr.mxu0 0.0
      %2050 = vmatpush1.msra.mxu0 0.0
      %2051 = vmatprep.subr.mxu0 0.0
      %2052 = vmatpush1.msra.mxu0 0.0
      %2053 = vmatprep.subr.mxu0 0.0
      %2054 = vmatpush1.msra.mxu0 0.0
      %2055 = vmatprep.subr.mxu0 0.0
      %2056 = vmatpush1.msra.mxu0 0.0
      %2057 = vmatprep.mubr.f32.mxu0 0.0
      %v2058 = vand.u32 %v1974, 4294901760
      %v2059 = vsub.f32 %v1974, %v2058
      %v2060 = vand.u32 %v2059, 4294901760
      %v2061 = vsub.f32 %v2059, %v2060
      %v2062 = vand.u32 %v2061, 4294901760
      %2063 = vmatmul.mubr.f32.gmra.mrb[0].mxu0 %v2062
      %v2064 = vpop.f32.mrb[0].mxu0
      %v2065 = vadd.f32 %v43, %v2064
      %v2066 = vpop.f32.mrb[0].mxu0
      %2067 = vdwg.mxu0
      %2068 = vmatprep.subr.mxu0 0.0
      %v2069 = vand.u32 %v27, 4294901760
      %v2070 = vsub.f32 %v27, %v2069
      %v2071 = vand.u32 %v2070, 4294901760
      %v2072 = vsub.f32 %v2070, %v2071
      %v2073 = vand.u32 %v2072, 4294901760
      %2074 = vmatpush1.msra.mxu0 %v2073
      %2075 = vmatprep.subr.mxu0 0.0
      %v2076 = vand.u32 %v28, 4294901760
      %v2077 = vsub.f32 %v28, %v2076
      %v2078 = vand.u32 %v2077, 4294901760
      %v2079 = vsub.f32 %v2077, %v2078
      %v2080 = vand.u32 %v2079, 4294901760
      %2081 = vmatpush1.msra.mxu0 %v2080
      %2082 = vmatprep.subr.mxu0 0.0
      %v2083 = vand.u32 %v29, 4294901760
      %v2084 = vsub.f32 %v29, %v2083
      %v2085 = vand.u32 %v2084, 4294901760
      %v2086 = vsub.f32 %v2084, %v2085
      %v2087 = vand.u32 %v2086, 4294901760
      %2088 = vmatpush1.msra.mxu0 %v2087
      %2089 = vmatprep.subr.mxu0 0.0
      %v2090 = vand.u32 %v30, 4294901760
      %v2091 = vsub.f32 %v30, %v2090
      %v2092 = vand.u32 %v2091, 4294901760
      %v2093 = vsub.f32 %v2091, %v2092
      %v2094 = vand.u32 %v2093, 4294901760
      %2095 = vmatpush1.msra.mxu0 %v2094
      %2096 = vmatprep.subr.mxu0 0.0
      %v2097 = vand.u32 %v31, 4294901760
      %v2098 = vsub.f32 %v31, %v2097
      %v2099 = vand.u32 %v2098, 4294901760
      %v2100 = vsub.f32 %v2098, %v2099
      %v2101 = vand.u32 %v2100, 4294901760
      %2102 = vmatpush1.msra.mxu0 %v2101
      %2103 = vmatprep.subr.mxu0 0.0
      %v2104 = vand.u32 %v32, 4294901760
      %v2105 = vsub.f32 %v32, %v2104
      %v2106 = vand.u32 %v2105, 4294901760
      %v2107 = vsub.f32 %v2105, %v2106
      %v2108 = vand.u32 %v2107, 4294901760
      %2109 = vmatpush1.msra.mxu0 %v2108
      %2110 = vmatprep.subr.mxu0 0.0
      %v2111 = vand.u32 %v33, 4294901760
      %v2112 = vsub.f32 %v33, %v2111
      %v2113 = vand.u32 %v2112, 4294901760
      %v2114 = vsub.f32 %v2112, %v2113
      %v2115 = vand.u32 %v2114, 4294901760
      %2116 = vmatpush1.msra.mxu0 %v2115
      %2117 = vmatprep.subr.mxu0 0.0
      %v2118 = vand.u32 %v34, 4294901760
      %v2119 = vsub.f32 %v34, %v2118
      %v2120 = vand.u32 %v2119, 4294901760
      %v2121 = vsub.f32 %v2119, %v2120
      %v2122 = vand.u32 %v2121, 4294901760
      %2123 = vmatpush1.msra.mxu0 %v2122
      %2124 = vmatprep.subr.mxu0 0.0
      %v2125 = vand.u32 %v35, 4294901760
      %v2126 = vsub.f32 %v35, %v2125
      %v2127 = vand.u32 %v2126, 4294901760
      %v2128 = vsub.f32 %v2126, %v2127
      %v2129 = vand.u32 %v2128, 4294901760
      %2130 = vmatpush1.msra.mxu0 %v2129
      %2131 = vmatprep.subr.mxu0 0.0
      %v2132 = vand.u32 %v36, 4294901760
      %v2133 = vsub.f32 %v36, %v2132
      %v2134 = vand.u32 %v2133, 4294901760
      %v2135 = vsub.f32 %v2133, %v2134
      %v2136 = vand.u32 %v2135, 4294901760
      %2137 = vmatpush1.msra.mxu0 %v2136
      %2138 = vmatprep.subr.mxu0 0.0
      %v2139 = vand.u32 %v37, 4294901760
      %v2140 = vsub.f32 %v37, %v2139
      %v2141 = vand.u32 %v2140, 4294901760
      %v2142 = vsub.f32 %v2140, %v2141
      %v2143 = vand.u32 %v2142, 4294901760
      %2144 = vmatpush1.msra.mxu0 %v2143
      %2145 = vmatprep.subr.mxu0 0.0
      %v2146 = vand.u32 %v38, 4294901760
      %v2147 = vsub.f32 %v38, %v2146
      %v2148 = vand.u32 %v2147, 4294901760
      %v2149 = vsub.f32 %v2147, %v2148
      %v2150 = vand.u32 %v2149, 4294901760
      %2151 = vmatpush1.msra.mxu0 %v2150
      %2152 = vmatprep.subr.mxu0 0.0
      %v2153 = vand.u32 %v39, 4294901760
      %v2154 = vsub.f32 %v39, %v2153
      %v2155 = vand.u32 %v2154, 4294901760
      %v2156 = vsub.f32 %v2154, %v2155
      %v2157 = vand.u32 %v2156, 4294901760
      %2158 = vmatpush1.msra.mxu0 %v2157
      %2159 = vmatprep.subr.mxu0 0.0
      %v2160 = vand.u32 %v40, 4294901760
      %v2161 = vsub.f32 %v40, %v2160
      %v2162 = vand.u32 %v2161, 4294901760
      %v2163 = vsub.f32 %v2161, %v2162
      %v2164 = vand.u32 %v2163, 4294901760
      %2165 = vmatpush1.msra.mxu0 %v2164
      %2166 = vmatprep.subr.mxu0 0.0
      %v2167 = vand.u32 %v41, 4294901760
      %v2168 = vsub.f32 %v41, %v2167
      %v2169 = vand.u32 %v2168, 4294901760
      %v2170 = vsub.f32 %v2168, %v2169
      %v2171 = vand.u32 %v2170, 4294901760
      %2172 = vmatpush1.msra.mxu0 %v2171
      %2173 = vmatprep.subr.mxu0 0.0
      %v2174 = vand.u32 %v42, 4294901760
      %v2175 = vsub.f32 %v42, %v2174
      %v2176 = vand.u32 %v2175, 4294901760
      %v2177 = vsub.f32 %v2175, %v2176
      %v2178 = vand.u32 %v2177, 4294901760
      %2179 = vmatpush1.msra.mxu0 %v2178
      %2180 = vmatprep.subr.mxu0 0.0
      %2181 = vmatpush1.msra.mxu0 0.0
      %2182 = vmatprep.subr.mxu0 0.0
      %2183 = vmatpush1.msra.mxu0 0.0
      %2184 = vmatprep.subr.mxu0 0.0
      %2185 = vmatpush1.msra.mxu0 0.0
      %2186 = vmatprep.subr.mxu0 0.0
      %2187 = vmatpush1.msra.mxu0 0.0
      %2188 = vmatprep.subr.mxu0 0.0
      %2189 = vmatpush1.msra.mxu0 0.0
      %2190 = vmatprep.subr.mxu0 0.0
      %2191 = vmatpush1.msra.mxu0 0.0
      %2192 = vmatprep.subr.mxu0 0.0
      %2193 = vmatpush1.msra.mxu0 0.0
      %2194 = vmatprep.subr.mxu0 0.0
      %2195 = vmatpush1.msra.mxu0 0.0
      %2196 = vmatprep.subr.mxu0 0.0
      %2197 = vmatpush1.msra.mxu0 0.0
      %2198 = vmatprep.subr.mxu0 0.0
      %2199 = vmatpush1.msra.mxu0 0.0
      %2200 = vmatprep.subr.mxu0 0.0
      %2201 = vmatpush1.msra.mxu0 0.0
      %2202 = vmatprep.subr.mxu0 0.0
      %2203 = vmatpush1.msra.mxu0 0.0
      %2204 = vmatprep.subr.mxu0 0.0
      %2205 = vmatpush1.msra.mxu0 0.0
      %2206 = vmatprep.subr.mxu0 0.0
      %2207 = vmatpush1.msra.mxu0 0.0
      %2208 = vmatprep.subr.mxu0 0.0
      %2209 = vmatpush1.msra.mxu0 0.0
      %2210 = vmatprep.subr.mxu0 0.0
      %2211 = vmatpush1.msra.mxu0 0.0
      %2212 = vmatprep.mubr.f32.mxu0 0.0
      %v2213 = vand.u32 %v1974, 4294901760
      %2214 = vmatmul.mubr.f32.gmra.mrb[0].mxu0 %v2213
      %v2215 = vpop.f32.mrb[0].mxu0
      %v2216 = vadd.f32 %v2065, %v2215
      %v2217 = vpop.f32.mrb[0].mxu0
      %2218 = vdwg.mxu0
      %2219 = vmatprep.subr.mxu0 0.0
      %v2220 = vand.u32 %v27, 4294901760
      %v2221 = vsub.f32 %v27, %v2220
      %2222 = vmatpush1.msra.mxu0 %v2221
      %2223 = vmatprep.subr.mxu0 0.0
      %v2224 = vand.u32 %v28, 4294901760
      %v2225 = vsub.f32 %v28, %v2224
      %2226 = vmatpush1.msra.mxu0 %v2225
      %2227 = vmatprep.subr.mxu0 0.0
      %v2228 = vand.u32 %v29, 4294901760
      %v2229 = vsub.f32 %v29, %v2228
      %2230 = vmatpush1.msra.mxu0 %v2229
      %2231 = vmatprep.subr.mxu0 0.0
      %v2232 = vand.u32 %v30, 4294901760
      %v2233 = vsub.f32 %v30, %v2232
      %2234 = vmatpush1.msra.mxu0 %v2233
      %2235 = vmatprep.subr.mxu0 0.0
      %v2236 = vand.u32 %v31, 4294901760
      %v2237 = vsub.f32 %v31, %v2236
      %2238 = vmatpush1.msra.mxu0 %v2237
      %2239 = vmatprep.subr.mxu0 0.0
      %v2240 = vand.u32 %v32, 4294901760
      %v2241 = vsub.f32 %v32, %v2240
      %2242 = vmatpush1.msra.mxu0 %v2241
      %2243 = vmatprep.subr.mxu0 0.0
      %v2244 = vand.u32 %v33, 4294901760
      %v2245 = vsub.f32 %v33, %v2244
      %2246 = vmatpush1.msra.mxu0 %v2245
      %2247 = vmatprep.subr.mxu0 0.0
      %v2248 = vand.u32 %v34, 4294901760
      %v2249 = vsub.f32 %v34, %v2248
      %2250 = vmatpush1.msra.mxu0 %v2249
      %2251 = vmatprep.subr.mxu0 0.0
      %v2252 = vand.u32 %v35, 4294901760
      %v2253 = vsub.f32 %v35, %v2252
      %2254 = vmatpush1.msra.mxu0 %v2253
      %2255 = vmatprep.subr.mxu0 0.0
      %v2256 = vand.u32 %v36, 4294901760
      %v2257 = vsub.f32 %v36, %v2256
      %2258 = vmatpush1.msra.mxu0 %v2257
      %2259 = vmatprep.subr.mxu0 0.0
      %v2260 = vand.u32 %v37, 4294901760
      %v2261 = vsub.f32 %v37, %v2260
      %2262 = vmatpush1.msra.mxu0 %v2261
      %2263 = vmatprep.subr.mxu0 0.0
      %v2264 = vand.u32 %v38, 4294901760
      %v2265 = vsub.f32 %v38, %v2264
      %2266 = vmatpush1.msra.mxu0 %v2265
      %2267 = vmatprep.subr.mxu0 0.0
      %v2268 = vand.u32 %v39, 4294901760
      %v2269 = vsub.f32 %v39, %v2268
      %2270 = vmatpush1.msra.mxu0 %v2269
      %2271 = vmatprep.subr.mxu0 0.0
      %v2272 = vand.u32 %v40, 4294901760
      %v2273 = vsub.f32 %v40, %v2272
      %2274 = vmatpush1.msra.mxu0 %v2273
      %2275 = vmatprep.subr.mxu0 0.0
      %v2276 = vand.u32 %v41, 4294901760
      %v2277 = vsub.f32 %v41, %v2276
      %2278 = vmatpush1.msra.mxu0 %v2277
      %2279 = vmatprep.subr.mxu0 0.0
      %v2280 = vand.u32 %v42, 4294901760
      %v2281 = vsub.f32 %v42, %v2280
      %2282 = vmatpush1.msra.mxu0 %v2281
      %2283 = vmatprep.subr.mxu0 0.0
      %2284 = vmatpush1.msra.mxu0 0.0
      %2285 = vmatprep.subr.mxu0 0.0
      %2286 = vmatpush1.msra.mxu0 0.0
      %2287 = vmatprep.subr.mxu0 0.0
      %2288 = vmatpush1.msra.mxu0 0.0
      %2289 = vmatprep.subr.mxu0 0.0
      %2290 = vmatpush1.msra.mxu0 0.0
      %2291 = vmatprep.subr.mxu0 0.0
      %2292 = vmatpush1.msra.mxu0 0.0
      %2293 = vmatprep.subr.mxu0 0.0
      %2294 = vmatpush1.msra.mxu0 0.0
      %2295 = vmatprep.subr.mxu0 0.0
      %2296 = vmatpush1.msra.mxu0 0.0
      %2297 = vmatprep.subr.mxu0 0.0
      %2298 = vmatpush1.msra.mxu0 0.0
      %2299 = vmatprep.subr.mxu0 0.0
      %2300 = vmatpush1.msra.mxu0 0.0
      %2301 = vmatprep.subr.mxu0 0.0
      %2302 = vmatpush1.msra.mxu0 0.0
      %2303 = vmatprep.subr.mxu0 0.0
      %2304 = vmatpush1.msra.mxu0 0.0
      %2305 = vmatprep.subr.mxu0 0.0
      %2306 = vmatpush1.msra.mxu0 0.0
      %2307 = vmatprep.subr.mxu0 0.0
      %2308 = vmatpush1.msra.mxu0 0.0
      %2309 = vmatprep.subr.mxu0 0.0
      %2310 = vmatpush1.msra.mxu0 0.0
      %2311 = vmatprep.subr.mxu0 0.0
      %2312 = vmatpush1.msra.mxu0 0.0
      %2313 = vmatprep.subr.mxu0 0.0
      %2314 = vmatpush1.msra.mxu0 0.0
      %2315 = vmatprep.mubr.f32.mxu0 0.0
      %v2316 = vand.u32 %v1974, 4294901760
      %v2317 = vsub.f32 %v1974, %v2316
      %2318 = vmatmul.mubr.f32.gmra.mrb[0].mxu0 %v2317
      %v2319 = vpop.f32.mrb[0].mxu0
      %v2320 = vadd.f32 %v2216, %v2319
      %v2321 = vpop.f32.mrb[0].mxu0
      %2322 = vdwg.mxu0
      %2323 = vmatprep.subr.mxu0 0.0
      %v2324 = vand.u32 %v27, 4294901760
      %2325 = vmatpush1.msra.mxu0 %v2324
      %2326 = vmatprep.subr.mxu0 0.0
      %v2327 = vand.u32 %v28, 4294901760
      %2328 = vmatpush1.msra.mxu0 %v2327
      %2329 = vmatprep.subr.mxu0 0.0
      %v2330 = vand.u32 %v29, 4294901760
      %2331 = vmatpush1.msra.mxu0 %v2330
      %2332 = vmatprep.subr.mxu0 0.0
      %v2333 = vand.u32 %v30, 4294901760
      %2334 = vmatpush1.msra.mxu0 %v2333
      %2335 = vmatprep.subr.mxu0 0.0
      %v2336 = vand.u32 %v31, 4294901760
      %2337 = vmatpush1.msra.mxu0 %v2336
      %2338 = vmatprep.subr.mxu0 0.0
      %v2339 = vand.u32 %v32, 4294901760
      %2340 = vmatpush1.msra.mxu0 %v2339
      %2341 = vmatprep.subr.mxu0 0.0
      %v2342 = vand.u32 %v33, 4294901760
      %2343 = vmatpush1.msra.mxu0 %v2342
      %2344 = vmatprep.subr.mxu0 0.0
      %v2345 = vand.u32 %v34, 4294901760
      %2346 = vmatpush1.msra.mxu0 %v2345
      %2347 = vmatprep.subr.mxu0 0.0
      %v2348 = vand.u32 %v35, 4294901760
      %2349 = vmatpush1.msra.mxu0 %v2348
      %2350 = vmatprep.subr.mxu0 0.0
      %v2351 = vand.u32 %v36, 4294901760
      %2352 = vmatpush1.msra.mxu0 %v2351
      %2353 = vmatprep.subr.mxu0 0.0
      %v2354 = vand.u32 %v37, 4294901760
      %2355 = vmatpush1.msra.mxu0 %v2354
      %2356 = vmatprep.subr.mxu0 0.0
      %v2357 = vand.u32 %v38, 4294901760
      %2358 = vmatpush1.msra.mxu0 %v2357
      %2359 = vmatprep.subr.mxu0 0.0
      %v2360 = vand.u32 %v39, 4294901760
      %2361 = vmatpush1.msra.mxu0 %v2360
      %2362 = vmatprep.subr.mxu0 0.0
      %v2363 = vand.u32 %v40, 4294901760
      %2364 = vmatpush1.msra.mxu0 %v2363
      %2365 = vmatprep.subr.mxu0 0.0
      %v2366 = vand.u32 %v41, 4294901760
      %2367 = vmatpush1.msra.mxu0 %v2366
      %2368 = vmatprep.subr.mxu0 0.0
      %v2369 = vand.u32 %v42, 4294901760
      %2370 = vmatpush1.msra.mxu0 %v2369
      %2371 = vmatprep.subr.mxu0 0.0
      %2372 = vmatpush1.msra.mxu0 0.0
      %2373 = vmatprep.subr.mxu0 0.0
      %2374 = vmatpush1.msra.mxu0 0.0
      %2375 = vmatprep.subr.mxu0 0.0
      %2376 = vmatpush1.msra.mxu0 0.0
      %2377 = vmatprep.subr.mxu0 0.0
      %2378 = vmatpush1.msra.mxu0 0.0
      %2379 = vmatprep.subr.mxu0 0.0
      %2380 = vmatpush1.msra.mxu0 0.0
      %2381 = vmatprep.subr.mxu0 0.0
      %2382 = vmatpush1.msra.mxu0 0.0
      %2383 = vmatprep.subr.mxu0 0.0
      %2384 = vmatpush1.msra.mxu0 0.0
      %2385 = vmatprep.subr.mxu0 0.0
      %2386 = vmatpush1.msra.mxu0 0.0
      %2387 = vmatprep.subr.mxu0 0.0
      %2388 = vmatpush1.msra.mxu0 0.0
      %2389 = vmatprep.subr.mxu0 0.0
      %2390 = vmatpush1.msra.mxu0 0.0
      %2391 = vmatprep.subr.mxu0 0.0
      %2392 = vmatpush1.msra.mxu0 0.0
      %2393 = vmatprep.subr.mxu0 0.0
      %2394 = vmatpush1.msra.mxu0 0.0
      %2395 = vmatprep.subr.mxu0 0.0
      %2396 = vmatpush1.msra.mxu0 0.0
      %2397 = vmatprep.subr.mxu0 0.0
      %2398 = vmatpush1.msra.mxu0 0.0
      %2399 = vmatprep.subr.mxu0 0.0
      %2400 = vmatpush1.msra.mxu0 0.0
      %2401 = vmatprep.subr.mxu0 0.0
      %2402 = vmatpush1.msra.mxu0 0.0
      %2403 = vmatprep.mubr.f32.mxu0 0.0
      %v2404 = vand.u32 %v1974, 4294901760
      %v2405 = vsub.f32 %v1974, %v2404
      %v2406 = vand.u32 %v2405, 4294901760
      %2407 = vmatmul.mubr.f32.gmra.mrb[0].mxu0 %v2406
      %v2408 = vpop.f32.mrb[0].mxu0
      %v2409 = vadd.f32 %v2320, %v2408
      %v2410 = vpop.f32.mrb[0].mxu0
      %2411 = vdwg.mxu0
      %2412 = vmatprep.subr.mxu0 0.0
      %v2413 = vand.u32 %v27, 4294901760
      %v2414 = vsub.f32 %v27, %v2413
      %v2415 = vand.u32 %v2414, 4294901760
      %2416 = vmatpush1.msra.mxu0 %v2415
      %2417 = vmatprep.subr.mxu0 0.0
      %v2418 = vand.u32 %v28, 4294901760
      %v2419 = vsub.f32 %v28, %v2418
      %v2420 = vand.u32 %v2419, 4294901760
      %2421 = vmatpush1.msra.mxu0 %v2420
      %2422 = vmatprep.subr.mxu0 0.0
      %v2423 = vand.u32 %v29, 4294901760
      %v2424 = vsub.f32 %v29, %v2423
      %v2425 = vand.u32 %v2424, 4294901760
      %2426 = vmatpush1.msra.mxu0 %v2425
      %2427 = vmatprep.subr.mxu0 0.0
      %v2428 = vand.u32 %v30, 4294901760
      %v2429 = vsub.f32 %v30, %v2428
      %v2430 = vand.u32 %v2429, 4294901760
      %2431 = vmatpush1.msra.mxu0 %v2430
      %2432 = vmatprep.subr.mxu0 0.0
      %v2433 = vand.u32 %v31, 4294901760
      %v2434 = vsub.f32 %v31, %v2433
      %v2435 = vand.u32 %v2434, 4294901760
      %2436 = vmatpush1.msra.mxu0 %v2435
      %2437 = vmatprep.subr.mxu0 0.0
      %v2438 = vand.u32 %v32, 4294901760
      %v2439 = vsub.f32 %v32, %v2438
      %v2440 = vand.u32 %v2439, 4294901760
      %2441 = vmatpush1.msra.mxu0 %v2440
      %2442 = vmatprep.subr.mxu0 0.0
      %v2443 = vand.u32 %v33, 4294901760
      %v2444 = vsub.f32 %v33, %v2443
      %v2445 = vand.u32 %v2444, 4294901760
      %2446 = vmatpush1.msra.mxu0 %v2445
      %2447 = vmatprep.subr.mxu0 0.0
      %v2448 = vand.u32 %v34, 4294901760
      %v2449 = vsub.f32 %v34, %v2448
      %v2450 = vand.u32 %v2449, 4294901760
      %2451 = vmatpush1.msra.mxu0 %v2450
      %2452 = vmatprep.subr.mxu0 0.0
      %v2453 = vand.u32 %v35, 4294901760
      %v2454 = vsub.f32 %v35, %v2453
      %v2455 = vand.u32 %v2454, 4294901760
      %2456 = vmatpush1.msra.mxu0 %v2455
      %2457 = vmatprep.subr.mxu0 0.0
      %v2458 = vand.u32 %v36, 4294901760
      %v2459 = vsub.f32 %v36, %v2458
      %v2460 = vand.u32 %v2459, 4294901760
      %2461 = vmatpush1.msra.mxu0 %v2460
      %2462 = vmatprep.subr.mxu0 0.0
      %v2463 = vand.u32 %v37, 4294901760
      %v2464 = vsub.f32 %v37, %v2463
      %v2465 = vand.u32 %v2464, 4294901760
      %2466 = vmatpush1.msra.mxu0 %v2465
      %2467 = vmatprep.subr.mxu0 0.0
      %v2468 = vand.u32 %v38, 4294901760
      %v2469 = vsub.f32 %v38, %v2468
      %v2470 = vand.u32 %v2469, 4294901760
      %2471 = vmatpush1.msra.mxu0 %v2470
      %2472 = vmatprep.subr.mxu0 0.0
      %v2473 = vand.u32 %v39, 4294901760
      %v2474 = vsub.f32 %v39, %v2473
      %v2475 = vand.u32 %v2474, 4294901760
      %2476 = vmatpush1.msra.mxu0 %v2475
      %2477 = vmatprep.subr.mxu0 0.0
      %v2478 = vand.u32 %v40, 4294901760
      %v2479 = vsub.f32 %v40, %v2478
      %v2480 = vand.u32 %v2479, 4294901760
      %2481 = vmatpush1.msra.mxu0 %v2480
      %2482 = vmatprep.subr.mxu0 0.0
      %v2483 = vand.u32 %v41, 4294901760
      %v2484 = vsub.f32 %v41, %v2483
      %v2485 = vand.u32 %v2484, 4294901760
      %2486 = vmatpush1.msra.mxu0 %v2485
      %2487 = vmatprep.subr.mxu0 0.0
      %v2488 = vand.u32 %v42, 4294901760
      %v2489 = vsub.f32 %v42, %v2488
      %v2490 = vand.u32 %v2489, 4294901760
      %2491 = vmatpush1.msra.mxu0 %v2490
      %2492 = vmatprep.subr.mxu0 0.0
      %2493 = vmatpush1.msra.mxu0 0.0
      %2494 = vmatprep.subr.mxu0 0.0
      %2495 = vmatpush1.msra.mxu0 0.0
      %2496 = vmatprep.subr.mxu0 0.0
      %2497 = vmatpush1.msra.mxu0 0.0
      %2498 = vmatprep.subr.mxu0 0.0
      %2499 = vmatpush1.msra.mxu0 0.0
      %2500 = vmatprep.subr.mxu0 0.0
      %2501 = vmatpush1.msra.mxu0 0.0
      %2502 = vmatprep.subr.mxu0 0.0
      %2503 = vmatpush1.msra.mxu0 0.0
      %2504 = vmatprep.subr.mxu0 0.0
      %2505 = vmatpush1.msra.mxu0 0.0
      %2506 = vmatprep.subr.mxu0 0.0
      %2507 = vmatpush1.msra.mxu0 0.0
      %2508 = vmatprep.subr.mxu0 0.0
      %2509 = vmatpush1.msra.mxu0 0.0
      %2510 = vmatprep.subr.mxu0 0.0
      %2511 = vmatpush1.msra.mxu0 0.0
      %2512 = vmatprep.subr.mxu0 0.0
      %2513 = vmatpush1.msra.mxu0 0.0
      %2514 = vmatprep.subr.mxu0 0.0
      %2515 = vmatpush1.msra.mxu0 0.0
      %2516 = vmatprep.subr.mxu0 0.0
      %2517 = vmatpush1.msra.mxu0 0.0
      %2518 = vmatprep.subr.mxu0 0.0
      %2519 = vmatpush1.msra.mxu0 0.0
      %2520 = vmatprep.subr.mxu0 0.0
      %2521 = vmatpush1.msra.mxu0 0.0
      %2522 = vmatprep.subr.mxu0 0.0
      %2523 = vmatpush1.msra.mxu0 0.0
      %2524 = vmatprep.mubr.f32.mxu0 0.0
      %v2525 = vand.u32 %v1974, 4294901760
      %2526 = vmatmul.mubr.f32.gmra.mrb[0].mxu0 %v2525
      %v2527 = vpop.f32.mrb[0].mxu0
      %v2528 = vadd.f32 %v2409, %v2527
      %v2529 = vpop.f32.mrb[0].mxu0
      %2530 = vdwg.mxu0
      %2531 = vmatprep.subr.mxu0 0.0
      %v2532 = vand.u32 %v27, 4294901760
      %2533 = vmatpush1.msra.mxu0 %v2532
      %2534 = vmatprep.subr.mxu0 0.0
      %v2535 = vand.u32 %v28, 4294901760
      %2536 = vmatpush1.msra.mxu0 %v2535
      %2537 = vmatprep.subr.mxu0 0.0
      %v2538 = vand.u32 %v29, 4294901760
      %2539 = vmatpush1.msra.mxu0 %v2538
      %2540 = vmatprep.subr.mxu0 0.0
      %v2541 = vand.u32 %v30, 4294901760
      %2542 = vmatpush1.msra.mxu0 %v2541
      %2543 = vmatprep.subr.mxu0 0.0
      %v2544 = vand.u32 %v31, 4294901760
      %2545 = vmatpush1.msra.mxu0 %v2544
      %2546 = vmatprep.subr.mxu0 0.0
      %v2547 = vand.u32 %v32, 4294901760
      %2548 = vmatpush1.msra.mxu0 %v2547
      %2549 = vmatprep.subr.mxu0 0.0
      %v2550 = vand.u32 %v33, 4294901760
      %2551 = vmatpush1.msra.mxu0 %v2550
      %2552 = vmatprep.subr.mxu0 0.0
      %v2553 = vand.u32 %v34, 4294901760
      %2554 = vmatpush1.msra.mxu0 %v2553
      %2555 = vmatprep.subr.mxu0 0.0
      %v2556 = vand.u32 %v35, 4294901760
      %2557 = vmatpush1.msra.mxu0 %v2556
      %2558 = vmatprep.subr.mxu0 0.0
      %v2559 = vand.u32 %v36, 4294901760
      %2560 = vmatpush1.msra.mxu0 %v2559
      %2561 = vmatprep.subr.mxu0 0.0
      %v2562 = vand.u32 %v37, 4294901760
      %2563 = vmatpush1.msra.mxu0 %v2562
      %2564 = vmatprep.subr.mxu0 0.0
      %v2565 = vand.u32 %v38, 4294901760
      %2566 = vmatpush1.msra.mxu0 %v2565
      %2567 = vmatprep.subr.mxu0 0.0
      %v2568 = vand.u32 %v39, 4294901760
      %2569 = vmatpush1.msra.mxu0 %v2568
      %2570 = vmatprep.subr.mxu0 0.0
      %v2571 = vand.u32 %v40, 4294901760
      %2572 = vmatpush1.msra.mxu0 %v2571
      %2573 = vmatprep.subr.mxu0 0.0
      %v2574 = vand.u32 %v41, 4294901760
      %2575 = vmatpush1.msra.mxu0 %v2574
      %2576 = vmatprep.subr.mxu0 0.0
      %v2577 = vand.u32 %v42, 4294901760
      %2578 = vmatpush1.msra.mxu0 %v2577
      %2579 = vmatprep.subr.mxu0 0.0
      %2580 = vmatpush1.msra.mxu0 0.0
      %2581 = vmatprep.subr.mxu0 0.0
      %2582 = vmatpush1.msra.mxu0 0.0
      %2583 = vmatprep.subr.mxu0 0.0
      %2584 = vmatpush1.msra.mxu0 0.0
      %2585 = vmatprep.subr.mxu0 0.0
      %2586 = vmatpush1.msra.mxu0 0.0
      %2587 = vmatprep.subr.mxu0 0.0
      %2588 = vmatpush1.msra.mxu0 0.0
      %2589 = vmatprep.subr.mxu0 0.0
      %2590 = vmatpush1.msra.mxu0 0.0
      %2591 = vmatprep.subr.mxu0 0.0
      %2592 = vmatpush1.msra.mxu0 0.0
      %2593 = vmatprep.subr.mxu0 0.0
      %2594 = vmatpush1.msra.mxu0 0.0
      %2595 = vmatprep.subr.mxu0 0.0
      %2596 = vmatpush1.msra.mxu0 0.0
      %2597 = vmatprep.subr.mxu0 0.0
      %2598 = vmatpush1.msra.mxu0 0.0
      %2599 = vmatprep.subr.mxu0 0.0
      %2600 = vmatpush1.msra.mxu0 0.0
      %2601 = vmatprep.subr.mxu0 0.0
      %2602 = vmatpush1.msra.mxu0 0.0
      %2603 = vmatprep.subr.mxu0 0.0
      %2604 = vmatpush1.msra.mxu0 0.0
      %2605 = vmatprep.subr.mxu0 0.0
      %2606 = vmatpush1.msra.mxu0 0.0
      %2607 = vmatprep.subr.mxu0 0.0
      %2608 = vmatpush1.msra.mxu0 0.0
      %2609 = vmatprep.subr.mxu0 0.0
      %2610 = vmatpush1.msra.mxu0 0.0
      %2611 = vmatprep.mubr.f32.mxu0 0.0
      %v2612 = vand.u32 %v1974, 4294901760
      %2613 = vmatmul.mubr.f32.gmra.mrb[0].mxu0 %v2612
      %v2614 = vpop.f32.mrb[0].mxu0
      %v2615 = vadd.f32 %v2528, %v2614
      %v2616 = vpop.f32.mrb[0].mxu0
      %2617 = vdwg.mxu0
      %v2618 = vsub.f32 %v2615, %v1974
      %v2619 = vand.u32 2147483647, %v2618
      %vm2620 = vcmask 1040384
      %v2621 = vsel %vm2620, %v2619, 0.0
      %2622 = vadd.xlane.f32.xlu0 %v2621
      %v2623 = vpop.xlane.xlu0 %2622
      %v2624 = vrot.slane %v2623, 4
      %v2625 = vadd.f32 %v2623, %v2624
      %v2626 = vrot.slane %v2625, 2
      %v2627 = vadd.f32 %v2625, %v2626
      %v2628 = vrot.slane %v2627, 1
      %v2629 = vadd.f32 %v2627, %v2628
      %s2630 = vtos %v2629
      %s2631 = sadd.s32 %s45, 1
    $region18: #{tpu_custom_call.1} parent=1 // loop_footer
      _
    $region19: #{tpu_custom_call.1} parent=1 // loop_footer_branch
      %44 = sbr.rel target = $region15
    $region20: #{tpu_custom_call.1} parent=1 // loop_exit
      _
    %2632 = vst [vmem:[#allocation5] sm:$0x1] %v47
    // Predicated region
    $region21: #{tpu_custom_call.1} parent=1 // pred_check
      _
    $region22: #{tpu_custom_call.1} parent=1 // pred_check_branch
      %2634 = sbr.rel (0) target = $region24
    $region23: #{tpu_custom_call.1} parent=1 // pred_region
      %s2636 = ssub.s32 16, 16
      %2637 = vsyncadd [#allocation4], %s2636
      %s2639 = sshll.u32 [#allocation5], 4
      %s2640 = int_to_ptr.vmem [resolvable:$true] %s2639
      %2642 = dma.vmem_to_hbm [thread:$0]  %s2640, 16, %s2, [#allocation4]
    $region24: #{tpu_custom_call.1} parent=1 // pred_fallthru
      _
    // Predicated region
    $region25: #{tpu_custom_call.1} parent=1 // pred_check
      _
    $region26: #{tpu_custom_call.1} parent=1 // pred_check_branch
      %2644 = sbr.rel (0) target = $region28
    $region27: #{tpu_custom_call.1} parent=1 // pred_region
      %2645 = dma.done [#allocation4], 16
    $region28: #{tpu_custom_call.1} parent=1 // pred_fallthru
      _
    %2646 = vsyncpa [#allocation3], 1
    %2647 = vsyncpa [#allocation4], 1

</llo_original>
